<compile_context>
chip_gen: v7x
topology: tpu7x:2x2x1
jax: 0.10.0
libtpu: 0.0.40
codegen_flags: <defaults>
</compile_context>

<pallas_src>
import functools

import numpy as np
import jax
import jax.numpy as jnp
from jax.experimental import pallas as pl
from jax.experimental.pallas import tpu as pltpu

BN_EPS = 1e-5
LANE = 128


def _round_up(v, m):
    return (v + m - 1) // m * m


def _pick_tile(hw, row_bytes, budget_bytes=8 << 20):
    """Largest spatial tile (multiple of 8, <=512) whose double-buffered
    streaming blocks stay under budget_bytes."""
    tile = 512
    while tile > 8 and 2 * tile * row_bytes > budget_bytes:
        tile //= 2
    return min(tile, _round_up(hw, 8))


# ---------------------------------------------------------------------------
# Pallas kernel: single fused-K matmul + folded-BN bias + shortcut + ReLU
# ---------------------------------------------------------------------------
def _conv_bn_act_kernel(p_ref, w_ref, b_ref, *rest, sc_mode):
    # sc_mode: 0 = no residual (conv1), 1 = identity residual,
    #          2 = 1x1-conv + BN residual (computed in-kernel)
    if sc_mode == 0:
        (out_ref,) = rest
    elif sc_mode == 1:
        sc_ref, out_ref = rest
    else:
        sc_ref, wsc_ref, bsc_ref, out_ref = rest

    # One big matmul: (TILE_HW, T*Cin) x (T*Cin, Cout), bf16 in / f32 acc.
    acc = jnp.dot(p_ref[0], w_ref[...], preferred_element_type=jnp.float32)
    y = acc + b_ref[...]  # folded BN bias (scale already folded into weights)

    if sc_mode == 1:
        y = y + sc_ref[0].astype(jnp.float32)
    elif sc_mode == 2:
        y = (y
             + jnp.dot(sc_ref[0], wsc_ref[...],
                       preferred_element_type=jnp.float32)
             + bsc_ref[...])

    out_ref[0] = jnp.maximum(y, 0.0).astype(out_ref.dtype)


def fused_conv_bn_relu(patches, w, bias, out_dtype,
                       sc=None, w_sc=None, b_sc=None):
    """patches: (N, HW, K) bf16, w: (K, Cout) bf16, bias: (1, Cout) f32.
    Optional sc: (N, HW, Csc) bf16 (+ w_sc/b_sc for a fused 1x1 shortcut).
    Returns (N, HW, Cout) in out_dtype."""
    N, HW, K = patches.shape
    Cout = w.shape[-1]
    has_sc = sc is not None
    has_sc_conv = w_sc is not None

    # Per-output-row streaming bytes -> spatial tile that fits VMEM comfortably.
    row_bytes = K * patches.dtype.itemsize + Cout * np.dtype(out_dtype).itemsize
    if has_sc:
        row_bytes += sc.shape[-1] * sc.dtype.itemsize
    tile = _pick_tile(HW, row_bytes)
    HW_pad = _round_up(HW, tile)

    def pad_hw(a):
        return jnp.pad(a, ((0, 0), (0, HW_pad - a.shape[1]), (0, 0)))

    args = [pad_hw(patches), w, bias]
    in_specs = [
        pl.BlockSpec((1, tile, K), lambda n, t: (n, t, 0)),
        pl.BlockSpec((K, Cout), lambda n, t: (0, 0)),
        pl.BlockSpec((1, Cout), lambda n, t: (0, 0)),
    ]
    if has_sc:
        args.append(pad_hw(sc))
        in_specs.append(
            pl.BlockSpec((1, tile, sc.shape[-1]), lambda n, t: (n, t, 0)))
    if has_sc_conv:
        args += [w_sc, b_sc]
        in_specs += [
            pl.BlockSpec(w_sc.shape, lambda n, t: (0, 0)),
            pl.BlockSpec((1, Cout), lambda n, t: (0, 0)),
        ]

    sc_mode = 0 if not has_sc else (2 if has_sc_conv else 1)
    kernel = functools.partial(_conv_bn_act_kernel, sc_mode=sc_mode)

    out = pl.pallas_call(
        kernel,
        out_shape=jax.ShapeDtypeStruct((N, HW_pad, Cout), out_dtype),
        grid_spec=pltpu.PrefetchScalarGridSpec(
            num_scalar_prefetch=0,
            grid=(N, HW_pad // tile),
            in_specs=in_specs,
            out_specs=pl.BlockSpec((1, tile, Cout), lambda n, t: (n, t, 0)),
        ),
        compiler_params=pltpu.CompilerParams(
            dimension_semantics=("parallel", "parallel"),
            vmem_limit_bytes=32 * 1024 * 1024),
    )(*args)
    return out[:, :HW, :]


# ---------------------------------------------------------------------------
# Plain-JAX glue: fused-K patch extraction, weight / BN folding, padding
# ---------------------------------------------------------------------------
def extract_patches_fused(x_nhwc, ksize, stride, pad):
    """x: (N,H,W,C) -> (N, Hout*Wout, ksize*ksize*C), taps fused along K
    (kh-major, then kw, then cin — must match fold_weights)."""
    N, H, W, C = x_nhwc.shape
    Hout = (H + 2 * pad - ksize) // stride + 1
    Wout = (W + 2 * pad - ksize) // stride + 1
    xp = jnp.pad(x_nhwc, ((0, 0), (pad, pad), (pad, pad), (0, 0)))
    taps = []
    for kh in range(ksize):
        for kw in range(ksize):
            sl = jax.lax.slice(
                xp,
                (0, kh, kw, 0),
                (N, kh + (Hout - 1) * stride + 1,
                 kw + (Wout - 1) * stride + 1, C),
                (1, stride, stride, 1))
            taps.append(sl.reshape(N, Hout * Wout, C))
    return jnp.concatenate(taps, axis=-1), Hout, Wout


def bn_fold(bn):
    gamma, beta, mean, var = bn
    scale = gamma / jnp.sqrt(var + BN_EPS)
    bias = beta - mean * scale
    return scale, bias


def fold_weights(w_oihw, scale, cin_pad, cout_pad):
    """(Cout,Cin,kh,kw) * BN scale -> (kh*kw*cin_pad, cout_pad) bf16,
    K order = kh-major, kw, cin (matches extract_patches_fused)."""
    cout, cin, kh, kw = w_oihw.shape
    w = w_oihw * scale[:, None, None, None]          # fold BN scale into Cout
    w = jnp.transpose(w, (2, 3, 1, 0))               # (kh, kw, cin, cout)
    w = jnp.pad(w, ((0, 0), (0, 0),
                    (0, cin_pad - cin), (0, cout_pad - cout)))
    return w.reshape(kh * kw * cin_pad, cout_pad).astype(jnp.bfloat16)


def pad_bias(b, cout_pad):
    return jnp.pad(b, (0, cout_pad - b.shape[0])) \
              .reshape(1, cout_pad).astype(jnp.float32)


# ---------------------------------------------------------------------------
# BasicBlock forward (Pallas) and pure-JAX reference
# ---------------------------------------------------------------------------
def basic_block_pallas(x_nchw, params, stride):
    x = jnp.transpose(x_nchw, (0, 2, 3, 1)).astype(jnp.float32)  # NHWC
    N, H, W, Cin = x.shape
    planes = params["conv1"].shape[0]
    Cin_p = _round_up(Cin, LANE)
    Cp = _round_up(planes, LANE)

    # Lane-dense channel padding + bf16 for MXU feed / HBM traffic.
    x_p = jnp.pad(x, ((0, 0), (0, 0), (0, 0), (0, Cin_p - Cin))) \
             .astype(jnp.bfloat16)

    # conv1 (3x3, stride) + bn1 + relu  -> bf16 intermediate
    s1, b1 = bn_fold(params["bn1"])
    w1 = fold_weights(params["conv1"], s1, Cin_p, Cp)
    p1, H1, W1 = extract_patches_fused(x_p, 3, stride, 1)
    out1 = fused_conv_bn_relu(p1, w1, pad_bias(b1, Cp),
                              out_dtype=jnp.bfloat16)          # (N, H1*W1, Cp)

    # conv2 (3x3, s=1) + bn2 + fused shortcut + relu
    out1_img = out1.reshape(N, H1, W1, Cp)
    p2, H2, W2 = extract_patches_fused(out1_img, 3, 1, 1)
    s2, b2 = bn_fold(params["bn2"])
    w2 = fold_weights(params["conv2"], s2, Cp, Cp)

    if stride != 1 or Cin != planes:
        ssc, bsc = bn_fold(params["bn_sc"])
        wsc = fold_weights(params["conv_sc"], ssc, Cin_p, Cp)   # (Cin_p, Cp)
        sc_in = x_p[:, ::stride, ::stride, :].reshape(N, H2 * W2, Cin_p)
        out2 = fused_conv_bn_relu(p2, w2, pad_bias(b2, Cp),
                                  out_dtype=jnp.float32,
                                  sc=sc_in, w_sc=wsc,
                                  b_sc=pad_bias(bsc, Cp))
    else:
        sc_in = x_p.reshape(N, H * W, Cin_p)
        out2 = fused_conv_bn_relu(p2, w2, pad_bias(b2, Cp),
                                  out_dtype=jnp.float32, sc=sc_in)

    y = out2[:, :, :planes].reshape(N, H2, W2, planes)
    return jnp.transpose(y, (0, 3, 1, 2))  # back to NCHW


def basic_block_reference(x_nchw, params, stride):
    x = jnp.transpose(x_nchw, (0, 2, 3, 1))

    def conv(inp, w_oihw, s, pad):
        w = jnp.transpose(w_oihw, (2, 3, 1, 0))  # HWIO
        return jax.lax.conv_general_dilated(
            inp, w, (s, s), [(pad, pad), (pad, pad)],
            dimension_numbers=("NHWC", "HWIO", "NHWC"))

    def bn(inp, p):
        g, b, m, v = p
        return (inp - m) / jnp.sqrt(v + BN_EPS) * g + b

    planes = params["conv1"].shape[0]
    out = jax.nn.relu(bn(conv(x, params["conv1"], stride, 1), params["bn1"]))
    out = bn(conv(out, params["conv2"], 1, 1), params["bn2"])
    if stride != 1 or x.shape[-1] != planes:
        sc = bn(conv(x, params["conv_sc"], stride, 0), params["bn_sc"])
    else:
        sc = x
    out = jax.nn.relu(out + sc)
    return jnp.transpose(out, (0, 3, 1, 2))


# ---------------------------------------------------------------------------
def make_params(key, in_planes, planes, stride):
    ks = jax.random.split(key, 12)

    def bn_params(k):
        k1, k2, k3, k4 = jax.random.split(k, 4)
        gamma = 1.0 + 0.1 * jax.random.normal(k1, (planes,), jnp.float32)
        beta = 0.1 * jax.random.normal(k2, (planes,), jnp.float32)
        mean = 0.1 * jax.random.normal(k3, (planes,), jnp.float32)
        var = jnp.abs(jax.random.normal(k4, (planes,), jnp.float32)) + 0.5
        return (gamma, beta, mean, var)

    params = {
        "conv1": 0.2 * jax.random.normal(ks[0], (planes, in_planes, 3, 3),
                                         jnp.float32),
        "bn1": bn_params(ks[1]),
        "conv2": 0.2 * jax.random.normal(ks[2], (planes, planes, 3, 3),
                                         jnp.float32),
        "bn2": bn_params(ks[3]),
    }
    if stride != 1 or in_planes != planes:
        params["conv_sc"] = 0.2 * jax.random.normal(
            ks[4], (planes, in_planes, 1, 1), jnp.float32)
        params["bn_sc"] = bn_params(ks[5])
    return params


def _check(x, params, stride, out_hw):
    fwd = jax.jit(basic_block_pallas, static_argnames=("stride",))
    out = jax.block_until_ready(fwd(x, params, stride))
    ref = jax.block_until_ready(basic_block_reference(x, params, stride))
    planes = params["conv1"].shape[0]
    assert out.shape == (x.shape[0], planes, out_hw, out_hw), out.shape
    # bf16 MXU inputs vs f32 reference: check max error relative to max |ref|.
    rel = float(jnp.max(jnp.abs(out - ref)) / jnp.max(jnp.abs(ref)))
    assert rel < 5e-2, rel


if __name__ == "__main__":
    key = jax.random.PRNGKey(0)
    kx1, kp1, kx2, kp2 = jax.random.split(key, 4)

    # Case 1: downsample block (stride=2, channel change) — fused 1x1+BN
    # shortcut computed inside the conv2 kernel.
    N, in_planes, planes, H, W, stride = 2, 4, 8, 16, 16, 2
    x1 = jax.random.normal(kx1, (N, in_planes, H, W), jnp.float32)
    _check(x1, make_params(kp1, in_planes, planes, stride), stride,
           H // stride)

    # Case 2: identity-shortcut block (stride=1, same channels).
    in_planes = planes = 8
    stride = 1
    x2 = jax.random.normal(kx2, (N, in_planes, H, W), jnp.float32)
    _check(x2, make_params(kp2, in_planes, planes, stride), stride, H)

    print("KERNEL_OK")
</pallas_src>

<mosaic_0001>
module attributes {stable_mosaic.version = 11 : i64} {
  func.func @_conv_bn_act_kernel(%arg0: i32, %arg1: i32, %arg2: memref<1x64x1152xbf16, #tpu.memory_space<vmem>>, %arg3: memref<1152x128xbf16, #tpu.memory_space<vmem>>, %arg4: memref<1x128xf32, #tpu.memory_space<vmem>>, %arg5: memref<1x64x128xbf16, #tpu.memory_space<vmem>>) attributes {dimension_semantics = [#tpu.dimension_semantics<parallel>, #tpu.dimension_semantics<parallel>], iteration_bounds = array<i64: 2, 1>, scalar_prefetch = 0 : i64, scratch_operands = 0 : i64, tpu.core_type = #tpu.core_type<tc>, window_params = [{transform_indices = @transform_0, window_bounds = array<i64: 1, 64, 1152>}, {pipeline_mode = #tpu.pipeline_mode<synchronous>, transform_indices = @transform_1, window_bounds = array<i64: 1152, 128>}, {pipeline_mode = #tpu.pipeline_mode<synchronous>, transform_indices = @transform_2, window_bounds = array<i64: 1, 128>}, {transform_indices = @transform_3, window_bounds = array<i64: 1, 64, 128>}]} {
    %c0 = arith.constant 0 : index
    %c0_0 = arith.constant 0 : index
    %c0_1 = arith.constant 0 : index
    %0 = vector.load %arg2[%c0, %c0_0, %c0_1] : memref<1x64x1152xbf16, #tpu.memory_space<vmem>>, vector<1x64x1152xbf16>
    %1 = vector.shape_cast %0 : vector<1x64x1152xbf16> to vector<64x1152xbf16>
    %c0_2 = arith.constant 0 : index
    %c0_3 = arith.constant 0 : index
    %2 = vector.load %arg3[%c0_2, %c0_3] : memref<1152x128xbf16, #tpu.memory_space<vmem>>, vector<1152x128xbf16>
    %cst = arith.constant dense<0.000000e+00> : vector<64x128xf32>
    %3 = tpu.matmul %1, %2, %cst {dimension_numbers = #tpu.dot_dimension_numbers<[1], [0], [0], [1], [0, 0, 1, 1], [], []>} : vector<64x1152xbf16>, vector<1152x128xbf16>, vector<64x128xf32> -> vector<64x128xf32>
    %c0_4 = arith.constant 0 : index
    %c0_5 = arith.constant 0 : index
    %4 = vector.load %arg4[%c0_4, %c0_5] : memref<1x128xf32, #tpu.memory_space<vmem>>, vector<1x128xf32>
    %5 = vector.broadcast %4 : vector<1x128xf32> to vector<64x128xf32>
    %6 = arith.addf %3, %5 : vector<64x128xf32>
    %cst_6 = arith.constant 0.000000e+00 : f32
    %7 = vector.broadcast %cst_6 : f32 to vector<64x128xf32>
    %8 = arith.maximumf %6, %7 : vector<64x128xf32>
    %9 = arith.truncf %8 : vector<64x128xf32> to vector<64x128xbf16>
    %c0_7 = arith.constant 0 : index
    %c0_8 = arith.constant 0 : index
    %c0_9 = arith.constant 0 : index
    %10 = vector.load %arg5[%c0_7, %c0_8, %c0_9] : memref<1x64x128xbf16, #tpu.memory_space<vmem>>, vector<1x64x128xbf16>
    %11 = vector.shape_cast %10 : vector<1x64x128xbf16> to vector<64x128xbf16>
    %12 = vector.shape_cast %9 : vector<64x128xbf16> to vector<1x64x128xbf16>
    tpu.vector_store %arg5[%c0_7, %c0_8, %c0_9], %12 {strides = array<i32>} : memref<1x64x128xbf16, #tpu.memory_space<vmem>>, vector<1x64x128xbf16>,
    return
  }
  func.func @transform_0(%arg0: i32, %arg1: i32) -> (i32, i32, i32) {
    %c0_i32 = arith.constant 0 : i32
    %c0_i32_0 = arith.constant 0 : i32
    return %arg0, %arg1, %c0_i32 : i32, i32, i32
  }
  func.func @transform_1(%arg0: i32, %arg1: i32) -> (i32, i32) {
    %c0_i32 = arith.constant 0 : i32
    %c0_i32_0 = arith.constant 0 : i32
    %c0_i32_1 = arith.constant 0 : i32
    return %c0_i32, %c0_i32_0 : i32, i32
  }
  func.func @transform_2(%arg0: i32, %arg1: i32) -> (i32, i32) {
    %c0_i32 = arith.constant 0 : i32
    %c0_i32_0 = arith.constant 0 : i32
    %c0_i32_1 = arith.constant 0 : i32
    return %c0_i32, %c0_i32_0 : i32, i32
  }
  func.func @transform_3(%arg0: i32, %arg1: i32) -> (i32, i32, i32) {
    %c0_i32 = arith.constant 0 : i32
    %c0_i32_0 = arith.constant 0 : i32
    return %arg0, %arg1, %c0_i32 : i32, i32, i32
  }
}

module attributes {stable_mosaic.version = 11 : i64} {
  func.func @_conv_bn_act_kernel(%arg0: i32, %arg1: i32, %arg2: memref<1x64x1152xbf16, #tpu.memory_space<vmem>>, %arg3: memref<1152x128xbf16, #tpu.memory_space<vmem>>, %arg4: memref<1x128xf32, #tpu.memory_space<vmem>>, %arg5: memref<1x64x128xbf16, #tpu.memory_space<vmem>>, %arg6: memref<128x128xbf16, #tpu.memory_space<vmem>>, %arg7: memref<1x128xf32, #tpu.memory_space<vmem>>, %arg8: memref<1x64x128xf32, #tpu.memory_space<vmem>>) attributes {dimension_semantics = [#tpu.dimension_semantics<parallel>, #tpu.dimension_semantics<parallel>], iteration_bounds = array<i64: 2, 1>, scalar_prefetch = 0 : i64, scratch_operands = 0 : i64, tpu.core_type = #tpu.core_type<tc>, window_params = [{transform_indices = @transform_0, window_bounds = array<i64: 1, 64, 1152>}, {pipeline_mode = #tpu.pipeline_mode<synchronous>, transform_indices = @transform_1, window_bounds = array<i64: 1152, 128>}, {pipeline_mode = #tpu.pipeline_mode<synchronous>, transform_indices = @transform_2, window_bounds = array<i64: 1, 128>}, {transform_indices = @transform_3, window_bounds = array<i64: 1, 64, 128>}, {pipeline_mode = #tpu.pipeline_mode<synchronous>, transform_indices = @transform_4, window_bounds = array<i64: 128, 128>}, {pipeline_mode = #tpu.pipeline_mode<synchronous>, transform_indices = @transform_5, window_bounds = array<i64: 1, 128>}, {transform_indices = @transform_6, window_bounds = array<i64: 1, 64, 128>}]} {
    %c0 = arith.constant 0 : index
    %c0_0 = arith.constant 0 : index
    %c0_1 = arith.constant 0 : index
    %0 = vector.load %arg2[%c0, %c0_0, %c0_1] : memref<1x64x1152xbf16, #tpu.memory_space<vmem>>, vector<1x64x1152xbf16>
    %1 = vector.shape_cast %0 : vector<1x64x1152xbf16> to vector<64x1152xbf16>
    %c0_2 = arith.constant 0 : index
    %c0_3 = arith.constant 0 : index
    %2 = vector.load %arg3[%c0_2, %c0_3] : memref<1152x128xbf16, #tpu.memory_space<vmem>>, vector<1152x128xbf16>
    %cst = arith.constant dense<0.000000e+00> : vector<64x128xf32>
    %3 = tpu.matmul %1, %2, %cst {dimension_numbers = #tpu.dot_dimension_numbers<[1], [0], [0], [1], [0, 0, 1, 1], [], []>} : vector<64x1152xbf16>, vector<1152x128xbf16>, vector<64x128xf32> -> vector<64x128xf32>
    %c0_4 = arith.constant 0 : index
    %c0_5 = arith.constant 0 : index
    %4 = vector.load %arg4[%c0_4, %c0_5] : memref<1x128xf32, #tpu.memory_space<vmem>>, vector<1x128xf32>
    %5 = vector.broadcast %4 : vector<1x128xf32> to vector<64x128xf32>
    %6 = arith.addf %3, %5 : vector<64x128xf32>
    %c0_6 = arith.constant 0 : index
    %c0_7 = arith.constant 0 : index
    %c0_8 = arith.constant 0 : index
    %7 = vector.load %arg5[%c0_6, %c0_7, %c0_8] : memref<1x64x128xbf16, #tpu.memory_space<vmem>>, vector<1x64x128xbf16>
    %8 = vector.shape_cast %7 : vector<1x64x128xbf16> to vector<64x128xbf16>
    %c0_9 = arith.constant 0 : index
    %c0_10 = arith.constant 0 : index
    %9 = vector.load %arg6[%c0_9, %c0_10] : memref<128x128xbf16, #tpu.memory_space<vmem>>, vector<128x128xbf16>
    %cst_11 = arith.constant dense<0.000000e+00> : vector<64x128xf32>
    %10 = tpu.matmul %8, %9, %cst_11 {dimension_numbers = #tpu.dot_dimension_numbers<[1], [0], [0], [1], [0, 0, 1, 1], [], []>} : vector<64x128xbf16>, vector<128x128xbf16>, vector<64x128xf32> -> vector<64x128xf32>
    %11 = arith.addf %6, %10 : vector<64x128xf32>
    %c0_12 = arith.constant 0 : index
    %c0_13 = arith.constant 0 : index
    %12 = vector.load %arg7[%c0_12, %c0_13] : memref<1x128xf32, #tpu.memory_space<vmem>>, vector<1x128xf32>
    %13 = vector.broadcast %12 : vector<1x128xf32> to vector<64x128xf32>
    %14 = arith.addf %11, %13 : vector<64x128xf32>
    %cst_14 = arith.constant 0.000000e+00 : f32
    %15 = vector.broadcast %cst_14 : f32 to vector<64x128xf32>
    %16 = arith.maximumf %14, %15 : vector<64x128xf32>
    %c0_15 = arith.constant 0 : index
    %c0_16 = arith.constant 0 : index
    %c0_17 = arith.constant 0 : index
    %17 = vector.load %arg8[%c0_15, %c0_16, %c0_17] : memref<1x64x128xf32, #tpu.memory_space<vmem>>, vector<1x64x128xf32>
    %18 = vector.shape_cast %17 : vector<1x64x128xf32> to vector<64x128xf32>
    %19 = vector.shape_cast %16 : vector<64x128xf32> to vector<1x64x128xf32>
    tpu.vector_store %arg8[%c0_15, %c0_16, %c0_17], %19 {strides = array<i32>} : memref<1x64x128xf32, #tpu.memory_space<vmem>>, vector<1x64x128xf32>,
    return
  }
  func.func @transform_0(%arg0: i32, %arg1: i32) -> (i32, i32, i32) {
    %c0_i32 = arith.constant 0 : i32
    %c0_i32_0 = arith.constant 0 : i32
    return %arg0, %arg1, %c0_i32 : i32, i32, i32
  }
  func.func @transform_1(%arg0: i32, %arg1: i32) -> (i32, i32) {
    %c0_i32 = arith.constant 0 : i32
    %c0_i32_0 = arith.constant 0 : i32
    %c0_i32_1 = arith.constant 0 : i32
    return %c0_i32, %c0_i32_0 : i32, i32
  }
  func.func @transform_2(%arg0: i32, %arg1: i32) -> (i32, i32) {
    %c0_i32 = arith.constant 0 : i32
    %c0_i32_0 = arith.constant 0 : i32
    %c0_i32_1 = arith.constant 0 : i32
    return %c0_i32, %c0_i32_0 : i32, i32
  }
  func.func @transform_3(%arg0: i32, %arg1: i32) -> (i32, i32, i32) {
    %c0_i32 = arith.constant 0 : i32
    %c0_i32_0 = arith.constant 0 : i32
    return %arg0, %arg1, %c0_i32 : i32, i32, i32
  }
  func.func @transform_4(%arg0: i32, %arg1: i32) -> (i32, i32) {
    %c0_i32 = arith.constant 0 : i32
    %c0_i32_0 = arith.constant 0 : i32
    %c0_i32_1 = arith.constant 0 : i32
    return %c0_i32, %c0_i32_0 : i32, i32
  }
  func.func @transform_5(%arg0: i32, %arg1: i32) -> (i32, i32) {
    %c0_i32 = arith.constant 0 : i32
    %c0_i32_0 = arith.constant 0 : i32
    %c0_i32_1 = arith.constant 0 : i32
    return %c0_i32, %c0_i32_0 : i32, i32
  }
  func.func @transform_6(%arg0: i32, %arg1: i32) -> (i32, i32, i32) {
    %c0_i32 = arith.constant 0 : i32
    %c0_i32_0 = arith.constant 0 : i32
    return %arg0, %arg1, %c0_i32 : i32, i32, i32
  }
}

</mosaic_0001>

<llo_original>
// kernel: basic_block_pallas.2
$region0: #{basic_block_pallas.2}
  #allocation0 [shape = 'u32[]', space=smem, size = 0x4, offset = 0x4, fixed_abs, tag = 'smem constant byte address 0x4 - core index']
  #allocation1 [shape = 'u32[144,128]{1,0:T(1,128)}', space=vmem, size = 0x12000, scoped, tag = 'internal scratch']
  %s0 = inlined_call_operand.vmem [shape: bf16[2,64,1152], index: 0, kind: input, shape index: {}]
  %s1 = inlined_call_operand.vmem [shape: bf16[1152,128], index: 1, kind: input, shape index: {}]
  %s2 = inlined_call_operand.vmem [shape: f32[1,128], index: 2, kind: input, shape index: {}]
  %s3 = inlined_call_operand.vmem [shape: bf16[2,64,128], index: 3, kind: output, shape index: {}]
  %s4 = sld [smem:[#allocation0]]
  $region45: #{basic_block_pallas.2} parent=0
    _
  %s6 = ssub.s32 1, %s4
  %s7 = scalar_select 0, %s6, %s4
  loop: start=0, step=1, limit=4
  $region2: #{basic_block_pallas.2} parent=0 // loop_pre_header
    _
  $region3: #{basic_block_pallas.2} parent=0 // loop_header
    %s9 = sphi 0, %s13
    %p10 = scmp.ge.s32.totalorder %s9, 4
    %s16 = sphi 0, %s28
    %s17 = sphi 0, %s24
    %s18 = sphi 0, %s16
    %s19 = sphi 0, %s17
    %s20 = sphi 0, %s18
    %s21 = sphi 0, %s19
    %s33 = sphi 0, %s35
    %s36 = sphi 0, %s33
    %s37 = sphi 0, %s36
    %s53 = sphi 0, %s37
    %s57 = sphi 0, %s57
    %s59 = sphi 0, %s57
    %s60 = sphi 0, %s59
    %s74 = sphi 0, %s60
    %s78 = sphi 0, %s78
    %s80 = sphi 0, %s78
    %s81 = sphi 0, %s80
    %s95 = sphi 0, %s81
    %s103 = sphi 0, %s105
    %s106 = sphi 0, %s103
    %s107 = sphi 0, %s106
    %s123 = sphi 0, %s107
  $region4: #{basic_block_pallas.2} parent=0 // loop_header_branch
    %12 = sbr.rel (%p10) target = $region8
  $region5: #{basic_block_pallas.2} parent=0 // loop_body
    %s14 = ssub.s32 %s9, 1
    %s15 = ssub.s32 %s9, 2
    %s22 = sadd.s32 1, %s17
    %p23 = scmp.ge.s32.totalorder %s22, 1
    %s24 = scalar_select %p23, 0, %s22
    %s25 = sadd.s32 1, %s16
    %s26 = scalar_select %p23, %s25, %s16
    %p27 = scmp.ge.s32.totalorder %s26, 2
    %s28 = scalar_select %p27, 0, %s26
    %s29 = ssub.s32 %s16, %s28
    %s30 = ssub.s32 %s17, %s24
    %s31 = sor.u32 %s29, %s30
    %p32 = scmp.eq.s32.totalorder %s31, 0
    %s34 = sadd.s32 %s33, 1
    %s35 = scalar_select %p32, %s33, %s34
    %p38 = pneg %p32
    %p39 = scmp.eq.s32.totalorder %s9, 1
    %p40 = por %p38, %p39
    %p41 = scmp.ne.s32.totalorder %s33, %s36
    %p42 = scmp.eq.s32.totalorder %s9, 0
    %p43 = por %p41, %p42
    %p44 = scmp.ne.s32.totalorder %s33, %s36
    %p45 = scmp.eq.s32.totalorder %s14, 1
    %p46 = por %p44, %p45
    %p47 = scmp.ne.s32.totalorder %s36, %s37
    %p48 = scmp.eq.s32.totalorder %s14, 0
    %p49 = por %p47, %p48
    %p50 = scmp.ne.s32.totalorder %s36, %s37
    %p51 = scmp.eq.s32.totalorder %s15, 1
    %p52 = por %p50, %p51
    %p54 = scmp.ne.s32.totalorder %s37, %s53
    %p55 = scmp.eq.s32.totalorder %s15, 0
    %p56 = por %p54, %p55
    %s58 = sadd.s32 %s57, 1
    %p61 = scmp.eq.s32.totalorder %s9, 1
    %p62 = scmp.ne.s32.totalorder %s57, %s59
    %p63 = scmp.eq.s32.totalorder %s9, 0
    %p64 = por %p62, %p63
    %p65 = scmp.ne.s32.totalorder %s57, %s59
    %p66 = scmp.eq.s32.totalorder %s14, 1
    %p67 = por %p65, %p66
    %p68 = scmp.ne.s32.totalorder %s59, %s60
    %p69 = scmp.eq.s32.totalorder %s14, 0
    %p70 = por %p68, %p69
    %p71 = scmp.ne.s32.totalorder %s59, %s60
    %p72 = scmp.eq.s32.totalorder %s15, 1
    %p73 = por %p71, %p72
    %p75 = scmp.ne.s32.totalorder %s60, %s74
    %p76 = scmp.eq.s32.totalorder %s15, 0
    %p77 = por %p75, %p76
    %s79 = sadd.s32 %s78, 1
    %p82 = scmp.eq.s32.totalorder %s9, 1
    %p83 = scmp.ne.s32.totalorder %s78, %s80
    %p84 = scmp.eq.s32.totalorder %s9, 0
    %p85 = por %p83, %p84
    %p86 = scmp.ne.s32.totalorder %s78, %s80
    %p87 = scmp.eq.s32.totalorder %s14, 1
    %p88 = por %p86, %p87
    %p89 = scmp.ne.s32.totalorder %s80, %s81
    %p90 = scmp.eq.s32.totalorder %s14, 0
    %p91 = por %p89, %p90
    %p92 = scmp.ne.s32.totalorder %s80, %s81
    %p93 = scmp.eq.s32.totalorder %s15, 1
    %p94 = por %p92, %p93
    %p96 = scmp.ne.s32.totalorder %s81, %s95
    %p97 = scmp.eq.s32.totalorder %s15, 0
    %p98 = por %p96, %p97
    %s99 = ssub.s32 %s16, %s28
    %s100 = ssub.s32 %s17, %s24
    %s101 = sor.u32 %s99, %s100
    %p102 = scmp.eq.s32.totalorder %s101, 0
    %s104 = sadd.s32 %s103, 1
    %s105 = scalar_select %p102, %s103, %s104
    %p108 = pneg %p102
    %p109 = scmp.eq.s32.totalorder %s9, 1
    %p110 = por %p108, %p109
    %p111 = scmp.ne.s32.totalorder %s103, %s106
    %p112 = scmp.eq.s32.totalorder %s9, 0
    %p113 = por %p111, %p112
    %p114 = scmp.ne.s32.totalorder %s103, %s106
    %p115 = scmp.eq.s32.totalorder %s14, 1
    %p116 = por %p114, %p115
    %p117 = scmp.ne.s32.totalorder %s106, %s107
    %p118 = scmp.eq.s32.totalorder %s14, 0
    %p119 = por %p117, %p118
    %p120 = scmp.ne.s32.totalorder %s106, %s107
    %p121 = scmp.eq.s32.totalorder %s15, 1
    %p122 = por %p120, %p121
    %p124 = scmp.ne.s32.totalorder %s107, %s123
    %p125 = scmp.eq.s32.totalorder %s15, 0
    %p126 = por %p124, %p125
    %p127 = scmp.le.s32.totalorder 1, %s9
    %p128 = scmp.lt.s32.totalorder %s9, 3
    %p129 = pnand %p127, %p128
    %p130 = pneg %p129
    // Predicated region
    $region9: #{basic_block_pallas.2} parent=5 // pred_check
      _
    $region10: #{basic_block_pallas.2} parent=5 // pred_check_branch
      %132 = sbr.rel (%p129) target = $region12
    $region11: #{basic_block_pallas.2} parent=5 // pred_region
      %s133 = ssub.s32 %s9, 1
      // Predicated region
      $region13: #{basic_block_pallas.2} parent=11 // pred_check
        %p134 = pneg %p70
      $region14: #{basic_block_pallas.2} parent=11 // pred_check_branch
        %136 = sbr.rel (%p134) target = $region16
      $region15: #{basic_block_pallas.2} parent=11 // pred_region
        _
      $region16: #{basic_block_pallas.2} parent=11 // pred_fallthru
        _
      // Predicated region
      $region17: #{basic_block_pallas.2} parent=11 // pred_check
        %p137 = pneg %p91
      $region18: #{basic_block_pallas.2} parent=11 // pred_check_branch
        %139 = sbr.rel (%p137) target = $region20
      $region19: #{basic_block_pallas.2} parent=11 // pred_region
        _
      $region20: #{basic_block_pallas.2} parent=11 // pred_fallthru
        _
    $region12: #{basic_block_pallas.2} parent=5 // pred_fallthru
      _
    %p140 = scmp.lt.s32.totalorder %s9, 2
    // Predicated region
    $region21: #{basic_block_pallas.2} parent=5 // pred_check
      %p141 = pneg %p140
    $region22: #{basic_block_pallas.2} parent=5 // pred_check_branch
      %143 = sbr.rel (%p141) target = $region24
    $region23: #{basic_block_pallas.2} parent=5 // pred_region
      // Predicated region
      $region25: #{basic_block_pallas.2} parent=23 // pred_check
        %p144 = pneg %p43
      $region26: #{basic_block_pallas.2} parent=23 // pred_check_branch
        %146 = sbr.rel (%p144) target = $region28
      $region27: #{basic_block_pallas.2} parent=23 // pred_region
        %s147 = smul.u32 8, %s17
        %p148 = scmp.lt.s32.totalorder %s16, 1
        %s149 = scalar_select %p148, %s16, 1
        %p150 = scmp.lt.s32.totalorder %s147, 7
        %s151 = scalar_select %p150, %s147, 7
        %s152 = smul.addr %s151, 9
        %s153 = smul.addr %s149, 72
        %s154 = sadd.s32 %s152, %s153
        %s155 = smul.addr %s154, 4
        %s156 = scalar_lea.vmem %s0, %s155
        %s157 = smul.u32 8, %s17
      $region28: #{basic_block_pallas.2} parent=23 // pred_fallthru
        _
    $region24: #{basic_block_pallas.2} parent=5 // pred_fallthru
      _
    %p158 = scmp.le.s32.totalorder 1, %s9
    %p159 = scmp.lt.s32.totalorder %s9, 3
    %p160 = pnand %p158, %p159
    %p161 = pneg %p160
    // Predicated region
    $region29: #{basic_block_pallas.2} parent=5 // pred_check
      _
    $region30: #{basic_block_pallas.2} parent=5 // pred_check_branch
      %163 = sbr.rel (%p160) target = $region32
    $region31: #{basic_block_pallas.2} parent=5 // pred_region
      %s164 = ssub.s32 %s9, 1
      %s165 = smul.u32 8, %s19
      %p166 = scmp.lt.s32.totalorder %s18, 1
      %s167 = scalar_select %p166, %s18, 1
      %p168 = scmp.lt.s32.totalorder %s165, 7
      %s169 = scalar_select %p168, %s165, 7
      %s170 = smul.addr %s169, 9
      %s171 = smul.addr %s167, 72
      %s172 = sadd.s32 %s170, %s171
      %s173 = smul.addr %s172, 4
      %s174 = scalar_lea.vmem %s0, %s173
      %p175 = pneg %p49
      %p176 = pneg %p46
      %p177 = pneg %p70
      %p178 = pneg %p67
      %p179 = pneg %p91
      %p180 = pneg %p88
      %p181 = pneg %p119
      %p182 = pneg %p116
      %s183 = smul.u32 8, %s19
      %p184 = scmp.lt.s32.totalorder %s18, 1
      %s185 = scalar_select %p184, %s18, 1
      %p186 = scmp.lt.s32.totalorder %s183, 7
      %s187 = scalar_select %p186, %s183, 7
      %s188 = smul.addr %s185, 8
      %s189 = sadd.s32 %s187, %s188
      %s190 = smul.addr %s189, 4
      %s191 = scalar_lea.vmem %s3, %s190
      %s192 = smul.u32 8, %s19
      %p193 = scmp.lt.s32.totalorder %s18, 1
      %s194 = scalar_select %p193, %s18, 1
      %p195 = scmp.lt.s32.totalorder %s192, 7
      %s196 = scalar_select %p195, %s192, 7
      %s197 = smul.addr %s196, 9
      %s198 = smul.addr %s194, 72
      %s199 = sadd.s32 %s197, %s198
      %s200 = smul.addr %s199, 4
      %s201 = scalar_lea.vmem %s0, %s200
      %s202 = smul.u32 8, %s19
      %s203 = smul.u32 8, %s19
      %p204 = scmp.lt.s32.totalorder %s18, 1
      %s205 = scalar_select %p204, %s18, 1
      %p206 = scmp.lt.s32.totalorder %s203, 7
      %s207 = scalar_select %p206, %s203, 7
      %s208 = smul.addr %s205, 8
      %s209 = sadd.s32 %s207, %s208
      %s210 = smul.addr %s209, 4
      %s211 = scalar_lea.vmem %s3, %s210
      %s212 = smul.u32 8, %s19
      %v214 = vld [vmem:[%s201] sm:$0xff]
      %v215 = vld [vmem:[%s201 + $0x8] sm:$0xff]
      %v216 = vld [vmem:[%s201 + $0x10] sm:$0xff]
      %v217 = vld [vmem:[%s201 + $0x18] sm:$0xff]
      %v218 = vld [vmem:[%s201 + $0x20] sm:$0xf]
      %v219 = vld [vmem:[%s201 + $0x24] sm:$0xff]
      %v220 = vld [vmem:[%s201 + $0x2c] sm:$0xff]
      %v221 = vld [vmem:[%s201 + $0x34] sm:$0xff]
      %v222 = vld [vmem:[%s201 + $0x3c] sm:$0xff]
      %v223 = vld [vmem:[%s201 + $0x44] sm:$0xf]
      %v224 = vld [vmem:[%s201 + $0x48] sm:$0xff]
      %v225 = vld [vmem:[%s201 + $0x50] sm:$0xff]
      %v226 = vld [vmem:[%s201 + $0x58] sm:$0xff]
      %v227 = vld [vmem:[%s201 + $0x60] sm:$0xff]
      %v228 = vld [vmem:[%s201 + $0x68] sm:$0xf]
      %v229 = vld [vmem:[%s201 + $0x6c] sm:$0xff]
      %v230 = vld [vmem:[%s201 + $0x74] sm:$0xff]
      %v231 = vld [vmem:[%s201 + $0x7c] sm:$0xff]
      %v232 = vld [vmem:[%s201 + $0x84] sm:$0xff]
      %v233 = vld [vmem:[%s201 + $0x8c] sm:$0xf]
      %v234 = vld [vmem:[%s201 + $0x90] sm:$0xff]
      %v235 = vld [vmem:[%s201 + $0x98] sm:$0xff]
      %v236 = vld [vmem:[%s201 + $0xa0] sm:$0xff]
      %v237 = vld [vmem:[%s201 + $0xa8] sm:$0xff]
      %v238 = vld [vmem:[%s201 + $0xb0] sm:$0xf]
      %v239 = vld [vmem:[%s201 + $0xb4] sm:$0xff]
      %v240 = vld [vmem:[%s201 + $0xbc] sm:$0xff]
      %v241 = vld [vmem:[%s201 + $0xc4] sm:$0xff]
      %v242 = vld [vmem:[%s201 + $0xcc] sm:$0xff]
      %v243 = vld [vmem:[%s201 + $0xd4] sm:$0xf]
      %v244 = vld [vmem:[%s201 + $0xd8] sm:$0xff]
      %v245 = vld [vmem:[%s201 + $0xe0] sm:$0xff]
      %v246 = vld [vmem:[%s201 + $0xe8] sm:$0xff]
      %v247 = vld [vmem:[%s201 + $0xf0] sm:$0xff]
      %v248 = vld [vmem:[%s201 + $0xf8] sm:$0xf]
      %v249 = vld [vmem:[%s201 + $0xfc] sm:$0xff]
      %v250 = vld [vmem:[%s201 + $0x104] sm:$0xff]
      %v251 = vld [vmem:[%s201 + $0x10c] sm:$0xff]
      %v252 = vld [vmem:[%s201 + $0x114] sm:$0xff]
      %v253 = vld [vmem:[%s201 + $0x11c] sm:$0xf]
      %v254 = vld [vmem:[%s1] sm:$0xf]
      %v255 = vld [vmem:[%s1 + $0x4] sm:$0xf]
      %v256 = vld [vmem:[%s1 + $0x8] sm:$0xf]
      %v257 = vld [vmem:[%s1 + $0xc] sm:$0xf]
      %v258 = vld [vmem:[%s1 + $0x10] sm:$0xf]
      %v259 = vld [vmem:[%s1 + $0x14] sm:$0xf]
      %v260 = vld [vmem:[%s1 + $0x18] sm:$0xf]
      %v261 = vld [vmem:[%s1 + $0x1c] sm:$0xf]
      %v262 = vld [vmem:[%s1 + $0x20] sm:$0xf]
      %v263 = vld [vmem:[%s1 + $0x24] sm:$0xf]
      %v264 = vld [vmem:[%s1 + $0x28] sm:$0xf]
      %v265 = vld [vmem:[%s1 + $0x2c] sm:$0xf]
      %v266 = vld [vmem:[%s1 + $0x30] sm:$0xf]
      %v267 = vld [vmem:[%s1 + $0x34] sm:$0xf]
      %v268 = vld [vmem:[%s1 + $0x38] sm:$0xf]
      %v269 = vld [vmem:[%s1 + $0x3c] sm:$0xf]
      %v270 = vld [vmem:[%s1 + $0x40] sm:$0xf]
      %v271 = vld [vmem:[%s1 + $0x44] sm:$0xf]
      %v272 = vld [vmem:[%s1 + $0x48] sm:$0xf]
      %v273 = vld [vmem:[%s1 + $0x4c] sm:$0xf]
      %v274 = vld [vmem:[%s1 + $0x50] sm:$0xf]
      %v275 = vld [vmem:[%s1 + $0x54] sm:$0xf]
      %v276 = vld [vmem:[%s1 + $0x58] sm:$0xf]
      %v277 = vld [vmem:[%s1 + $0x5c] sm:$0xf]
      %v278 = vld [vmem:[%s1 + $0x60] sm:$0xf]
      %v279 = vld [vmem:[%s1 + $0x64] sm:$0xf]
      %v280 = vld [vmem:[%s1 + $0x68] sm:$0xf]
      %v281 = vld [vmem:[%s1 + $0x6c] sm:$0xf]
      %v282 = vld [vmem:[%s1 + $0x70] sm:$0xf]
      %v283 = vld [vmem:[%s1 + $0x74] sm:$0xf]
      %v284 = vld [vmem:[%s1 + $0x78] sm:$0xf]
      %v285 = vld [vmem:[%s1 + $0x7c] sm:$0xf]
      %v286 = vld [vmem:[%s1 + $0x80] sm:$0xf]
      %v287 = vld [vmem:[%s1 + $0x84] sm:$0xf]
      %v288 = vld [vmem:[%s1 + $0x88] sm:$0xf]
      %v289 = vld [vmem:[%s1 + $0x8c] sm:$0xf]
      %v290 = vld [vmem:[%s1 + $0x90] sm:$0xf]
      %v291 = vld [vmem:[%s1 + $0x94] sm:$0xf]
      %v292 = vld [vmem:[%s1 + $0x98] sm:$0xf]
      %v293 = vld [vmem:[%s1 + $0x9c] sm:$0xf]
      %v294 = vld [vmem:[%s1 + $0xa0] sm:$0xf]
      %v295 = vld [vmem:[%s1 + $0xa4] sm:$0xf]
      %v296 = vld [vmem:[%s1 + $0xa8] sm:$0xf]
      %v297 = vld [vmem:[%s1 + $0xac] sm:$0xf]
      %v298 = vld [vmem:[%s1 + $0xb0] sm:$0xf]
      %v299 = vld [vmem:[%s1 + $0xb4] sm:$0xf]
      %v300 = vld [vmem:[%s1 + $0xb8] sm:$0xf]
      %v301 = vld [vmem:[%s1 + $0xbc] sm:$0xf]
      %v302 = vld [vmem:[%s1 + $0xc0] sm:$0xf]
      %v303 = vld [vmem:[%s1 + $0xc4] sm:$0xf]
      %v304 = vld [vmem:[%s1 + $0xc8] sm:$0xf]
      %v305 = vld [vmem:[%s1 + $0xcc] sm:$0xf]
      %v306 = vld [vmem:[%s1 + $0xd0] sm:$0xf]
      %v307 = vld [vmem:[%s1 + $0xd4] sm:$0xf]
      %v308 = vld [vmem:[%s1 + $0xd8] sm:$0xf]
      %v309 = vld [vmem:[%s1 + $0xdc] sm:$0xf]
      %v310 = vld [vmem:[%s1 + $0xe0] sm:$0xf]
      %v311 = vld [vmem:[%s1 + $0xe4] sm:$0xf]
      %v312 = vld [vmem:[%s1 + $0xe8] sm:$0xf]
      %v313 = vld [vmem:[%s1 + $0xec] sm:$0xf]
      %v314 = vld [vmem:[%s1 + $0xf0] sm:$0xf]
      %v315 = vld [vmem:[%s1 + $0xf4] sm:$0xf]
      %v316 = vld [vmem:[%s1 + $0xf8] sm:$0xf]
      %v317 = vld [vmem:[%s1 + $0xfc] sm:$0xf]
      %v318 = vld [vmem:[%s1 + $0x100] sm:$0xf]
      %v319 = vld [vmem:[%s1 + $0x104] sm:$0xf]
      %v320 = vld [vmem:[%s1 + $0x108] sm:$0xf]
      %v321 = vld [vmem:[%s1 + $0x10c] sm:$0xf]
      %v322 = vld [vmem:[%s1 + $0x110] sm:$0xf]
      %v323 = vld [vmem:[%s1 + $0x114] sm:$0xf]
      %v324 = vld [vmem:[%s1 + $0x118] sm:$0xf]
      %v325 = vld [vmem:[%s1 + $0x11c] sm:$0xf]
      %v326 = vld [vmem:[%s1 + $0x120] sm:$0xf]
      %v327 = vld [vmem:[%s1 + $0x124] sm:$0xf]
      %v328 = vld [vmem:[%s1 + $0x128] sm:$0xf]
      %v329 = vld [vmem:[%s1 + $0x12c] sm:$0xf]
      %v330 = vld [vmem:[%s1 + $0x130] sm:$0xf]
      %v331 = vld [vmem:[%s1 + $0x134] sm:$0xf]
      %v332 = vld [vmem:[%s1 + $0x138] sm:$0xf]
      %v333 = vld [vmem:[%s1 + $0x13c] sm:$0xf]
      %v334 = vld [vmem:[%s1 + $0x140] sm:$0xf]
      %v335 = vld [vmem:[%s1 + $0x144] sm:$0xf]
      %v336 = vld [vmem:[%s1 + $0x148] sm:$0xf]
      %v337 = vld [vmem:[%s1 + $0x14c] sm:$0xf]
      %v338 = vld [vmem:[%s1 + $0x150] sm:$0xf]
      %v339 = vld [vmem:[%s1 + $0x154] sm:$0xf]
      %v340 = vld [vmem:[%s1 + $0x158] sm:$0xf]
      %v341 = vld [vmem:[%s1 + $0x15c] sm:$0xf]
      %v342 = vld [vmem:[%s1 + $0x160] sm:$0xf]
      %v343 = vld [vmem:[%s1 + $0x164] sm:$0xf]
      %v344 = vld [vmem:[%s1 + $0x168] sm:$0xf]
      %v345 = vld [vmem:[%s1 + $0x16c] sm:$0xf]
      %v346 = vld [vmem:[%s1 + $0x170] sm:$0xf]
      %v347 = vld [vmem:[%s1 + $0x174] sm:$0xf]
      %v348 = vld [vmem:[%s1 + $0x178] sm:$0xf]
      %v349 = vld [vmem:[%s1 + $0x17c] sm:$0xf]
      %v350 = vld [vmem:[%s1 + $0x180] sm:$0xf]
      %v351 = vld [vmem:[%s1 + $0x184] sm:$0xf]
      %v352 = vld [vmem:[%s1 + $0x188] sm:$0xf]
      %v353 = vld [vmem:[%s1 + $0x18c] sm:$0xf]
      %v354 = vld [vmem:[%s1 + $0x190] sm:$0xf]
      %v355 = vld [vmem:[%s1 + $0x194] sm:$0xf]
      %v356 = vld [vmem:[%s1 + $0x198] sm:$0xf]
      %v357 = vld [vmem:[%s1 + $0x19c] sm:$0xf]
      %v358 = vld [vmem:[%s1 + $0x1a0] sm:$0xf]
      %v359 = vld [vmem:[%s1 + $0x1a4] sm:$0xf]
      %v360 = vld [vmem:[%s1 + $0x1a8] sm:$0xf]
      %v361 = vld [vmem:[%s1 + $0x1ac] sm:$0xf]
      %v362 = vld [vmem:[%s1 + $0x1b0] sm:$0xf]
      %v363 = vld [vmem:[%s1 + $0x1b4] sm:$0xf]
      %v364 = vld [vmem:[%s1 + $0x1b8] sm:$0xf]
      %v365 = vld [vmem:[%s1 + $0x1bc] sm:$0xf]
      %v366 = vld [vmem:[%s1 + $0x1c0] sm:$0xf]
      %v367 = vld [vmem:[%s1 + $0x1c4] sm:$0xf]
      %v368 = vld [vmem:[%s1 + $0x1c8] sm:$0xf]
      %v369 = vld [vmem:[%s1 + $0x1cc] sm:$0xf]
      %v370 = vld [vmem:[%s1 + $0x1d0] sm:$0xf]
      %v371 = vld [vmem:[%s1 + $0x1d4] sm:$0xf]
      %v372 = vld [vmem:[%s1 + $0x1d8] sm:$0xf]
      %v373 = vld [vmem:[%s1 + $0x1dc] sm:$0xf]
      %v374 = vld [vmem:[%s1 + $0x1e0] sm:$0xf]
      %v375 = vld [vmem:[%s1 + $0x1e4] sm:$0xf]
      %v376 = vld [vmem:[%s1 + $0x1e8] sm:$0xf]
      %v377 = vld [vmem:[%s1 + $0x1ec] sm:$0xf]
      %v378 = vld [vmem:[%s1 + $0x1f0] sm:$0xf]
      %v379 = vld [vmem:[%s1 + $0x1f4] sm:$0xf]
      %v380 = vld [vmem:[%s1 + $0x1f8] sm:$0xf]
      %v381 = vld [vmem:[%s1 + $0x1fc] sm:$0xf]
      %v382 = vld [vmem:[%s1 + $0x200] sm:$0xf]
      %v383 = vld [vmem:[%s1 + $0x204] sm:$0xf]
      %v384 = vld [vmem:[%s1 + $0x208] sm:$0xf]
      %v385 = vld [vmem:[%s1 + $0x20c] sm:$0xf]
      %v386 = vld [vmem:[%s1 + $0x210] sm:$0xf]
      %v387 = vld [vmem:[%s1 + $0x214] sm:$0xf]
      %v388 = vld [vmem:[%s1 + $0x218] sm:$0xf]
      %v389 = vld [vmem:[%s1 + $0x21c] sm:$0xf]
      %v390 = vld [vmem:[%s1 + $0x220] sm:$0xf]
      %v391 = vld [vmem:[%s1 + $0x224] sm:$0xf]
      %v392 = vld [vmem:[%s1 + $0x228] sm:$0xf]
      %v393 = vld [vmem:[%s1 + $0x22c] sm:$0xf]
      %v394 = vld [vmem:[%s1 + $0x230] sm:$0xf]
      %v395 = vld [vmem:[%s1 + $0x234] sm:$0xf]
      %v396 = vld [vmem:[%s1 + $0x238] sm:$0xf]
      %v397 = vld [vmem:[%s1 + $0x23c] sm:$0xf]
      %v398 = vld [vmem:[%s2] sm:$0x1]
      %v400 = vlaneseq
      %v401 = vshrl.u32 %v400, 7
      %v402 = vsub.s32 0, %v401
      %v403 = vrot.slane %v398, %v402
      %v445 = vunpack.c.l.b16 %v214
      %v446 = vunpack.c.h.b16 %v214
      %v447 = vunpack.c.l.b16 %v215
      %v448 = vunpack.c.h.b16 %v215
      %v449 = vunpack.c.l.b16 %v216
      %v450 = vunpack.c.h.b16 %v216
      %v451 = vunpack.c.l.b16 %v217
      %v452 = vunpack.c.h.b16 %v217
      %v453 = vunpack.c.l.b16 %v218
      %v454 = vunpack.c.l.b16 %v219
      %v455 = vunpack.c.h.b16 %v219
      %v456 = vunpack.c.l.b16 %v220
      %v457 = vunpack.c.h.b16 %v220
      %v458 = vunpack.c.l.b16 %v221
      %v459 = vunpack.c.h.b16 %v221
      %v460 = vunpack.c.l.b16 %v222
      %v461 = vunpack.c.h.b16 %v222
      %v462 = vunpack.c.l.b16 %v223
      %v463 = vunpack.c.l.b16 %v224
      %v464 = vunpack.c.h.b16 %v224
      %v465 = vunpack.c.l.b16 %v225
      %v466 = vunpack.c.h.b16 %v225
      %v467 = vunpack.c.l.b16 %v226
      %v468 = vunpack.c.h.b16 %v226
      %v469 = vunpack.c.l.b16 %v227
      %v470 = vunpack.c.h.b16 %v227
      %v471 = vunpack.c.l.b16 %v228
      %v472 = vunpack.c.l.b16 %v229
      %v473 = vunpack.c.h.b16 %v229
      %v474 = vunpack.c.l.b16 %v230
      %v475 = vunpack.c.h.b16 %v230
      %v476 = vunpack.c.l.b16 %v231
      %v477 = vunpack.c.h.b16 %v231
      %v478 = vunpack.c.l.b16 %v232
      %v479 = vunpack.c.h.b16 %v232
      %v480 = vunpack.c.l.b16 %v233
      %v481 = vunpack.c.l.b16 %v234
      %v482 = vunpack.c.h.b16 %v234
      %v483 = vunpack.c.l.b16 %v235
      %v484 = vunpack.c.h.b16 %v235
      %v485 = vunpack.c.l.b16 %v236
      %v486 = vunpack.c.h.b16 %v236
      %v487 = vunpack.c.l.b16 %v237
      %v488 = vunpack.c.h.b16 %v237
      %v489 = vunpack.c.l.b16 %v238
      %v490 = vunpack.c.l.b16 %v239
      %v491 = vunpack.c.h.b16 %v239
      %v492 = vunpack.c.l.b16 %v240
      %v493 = vunpack.c.h.b16 %v240
      %v494 = vunpack.c.l.b16 %v241
      %v495 = vunpack.c.h.b16 %v241
      %v496 = vunpack.c.l.b16 %v242
      %v497 = vunpack.c.h.b16 %v242
      %v498 = vunpack.c.l.b16 %v243
      %v499 = vunpack.c.l.b16 %v244
      %v500 = vunpack.c.h.b16 %v244
      %v501 = vunpack.c.l.b16 %v245
      %v502 = vunpack.c.h.b16 %v245
      %v503 = vunpack.c.l.b16 %v246
      %v504 = vunpack.c.h.b16 %v246
      %v505 = vunpack.c.l.b16 %v247
      %v506 = vunpack.c.h.b16 %v247
      %v507 = vunpack.c.l.b16 %v248
      %v508 = vunpack.c.l.b16 %v249
      %v509 = vunpack.c.h.b16 %v249
      %v510 = vunpack.c.l.b16 %v250
      %v511 = vunpack.c.h.b16 %v250
      %v512 = vunpack.c.l.b16 %v251
      %v513 = vunpack.c.h.b16 %v251
      %v514 = vunpack.c.l.b16 %v252
      %v515 = vunpack.c.h.b16 %v252
      %v516 = vunpack.c.l.b16 %v253
      %v517 = vpack.c.b16 %v454, %v445
      %v518 = vpack.c.b16 %v455, %v446
      %v519 = vpack.c.b16 %v456, %v447
      %v520 = vpack.c.b16 %v457, %v448
      %v521 = vpack.c.b16 %v458, %v449
      %v522 = vpack.c.b16 %v459, %v450
      %v523 = vpack.c.b16 %v460, %v451
      %v524 = vpack.c.b16 %v461, %v452
      %v525 = vpack.c.b16 %v462, %v453
      %v526 = vpack.c.b16 %v472, %v463
      %v527 = vpack.c.b16 %v473, %v464
      %v528 = vpack.c.b16 %v474, %v465
      %v529 = vpack.c.b16 %v475, %v466
      %v530 = vpack.c.b16 %v476, %v467
      %v531 = vpack.c.b16 %v477, %v468
      %v532 = vpack.c.b16 %v478, %v469
      %v533 = vpack.c.b16 %v479, %v470
      %v534 = vpack.c.b16 %v480, %v471
      %v535 = vpack.c.b16 %v490, %v481
      %v536 = vpack.c.b16 %v491, %v482
      %v537 = vpack.c.b16 %v492, %v483
      %v538 = vpack.c.b16 %v493, %v484
      %v539 = vpack.c.b16 %v494, %v485
      %v540 = vpack.c.b16 %v495, %v486
      %v541 = vpack.c.b16 %v496, %v487
      %v542 = vpack.c.b16 %v497, %v488
      %v543 = vpack.c.b16 %v498, %v489
      %v544 = vpack.c.b16 %v508, %v499
      %v545 = vpack.c.b16 %v509, %v500
      %v546 = vpack.c.b16 %v510, %v501
      %v547 = vpack.c.b16 %v511, %v502
      %v548 = vpack.c.b16 %v512, %v503
      %v549 = vpack.c.b16 %v513, %v504
      %v550 = vpack.c.b16 %v514, %v505
      %v551 = vpack.c.b16 %v515, %v506
      %v552 = vpack.c.b16 %v516, %v507
      %v733 = vunpack.c.l.b16 %v254
      %v734 = vunpack.c.l.b16 %v255
      %v735 = vunpack.c.l.b16 %v256
      %v736 = vunpack.c.l.b16 %v257
      %v737 = vunpack.c.l.b16 %v258
      %v738 = vunpack.c.l.b16 %v259
      %v739 = vunpack.c.l.b16 %v260
      %v740 = vunpack.c.l.b16 %v261
      %v741 = vunpack.c.l.b16 %v262
      %v742 = vunpack.c.l.b16 %v263
      %v743 = vunpack.c.l.b16 %v264
      %v744 = vunpack.c.l.b16 %v265
      %v745 = vunpack.c.l.b16 %v266
      %v746 = vunpack.c.l.b16 %v267
      %v747 = vunpack.c.l.b16 %v268
      %v748 = vunpack.c.l.b16 %v269
      %v749 = vunpack.c.l.b16 %v270
      %v750 = vunpack.c.l.b16 %v271
      %v751 = vunpack.c.l.b16 %v272
      %v752 = vunpack.c.l.b16 %v273
      %v753 = vunpack.c.l.b16 %v274
      %v754 = vunpack.c.l.b16 %v275
      %v755 = vunpack.c.l.b16 %v276
      %v756 = vunpack.c.l.b16 %v277
      %v757 = vunpack.c.l.b16 %v278
      %v758 = vunpack.c.l.b16 %v279
      %v759 = vunpack.c.l.b16 %v280
      %v760 = vunpack.c.l.b16 %v281
      %v761 = vunpack.c.l.b16 %v282
      %v762 = vunpack.c.l.b16 %v283
      %v763 = vunpack.c.l.b16 %v284
      %v764 = vunpack.c.l.b16 %v285
      %v765 = vunpack.c.l.b16 %v286
      %v766 = vunpack.c.l.b16 %v287
      %v767 = vunpack.c.l.b16 %v288
      %v768 = vunpack.c.l.b16 %v289
      %v769 = vunpack.c.l.b16 %v290
      %v770 = vunpack.c.l.b16 %v291
      %v771 = vunpack.c.l.b16 %v292
      %v772 = vunpack.c.l.b16 %v293
      %v773 = vunpack.c.l.b16 %v294
      %v774 = vunpack.c.l.b16 %v295
      %v775 = vunpack.c.l.b16 %v296
      %v776 = vunpack.c.l.b16 %v297
      %v777 = vunpack.c.l.b16 %v298
      %v778 = vunpack.c.l.b16 %v299
      %v779 = vunpack.c.l.b16 %v300
      %v780 = vunpack.c.l.b16 %v301
      %v781 = vunpack.c.l.b16 %v302
      %v782 = vunpack.c.l.b16 %v303
      %v783 = vunpack.c.l.b16 %v304
      %v784 = vunpack.c.l.b16 %v305
      %v785 = vunpack.c.l.b16 %v306
      %v786 = vunpack.c.l.b16 %v307
      %v787 = vunpack.c.l.b16 %v308
      %v788 = vunpack.c.l.b16 %v309
      %v789 = vunpack.c.l.b16 %v310
      %v790 = vunpack.c.l.b16 %v311
      %v791 = vunpack.c.l.b16 %v312
      %v792 = vunpack.c.l.b16 %v313
      %v793 = vunpack.c.l.b16 %v314
      %v794 = vunpack.c.l.b16 %v315
      %v795 = vunpack.c.l.b16 %v316
      %v796 = vunpack.c.l.b16 %v317
      %v797 = vunpack.c.l.b16 %v318
      %v798 = vunpack.c.l.b16 %v319
      %v799 = vunpack.c.l.b16 %v320
      %v800 = vunpack.c.l.b16 %v321
      %v801 = vunpack.c.l.b16 %v322
      %v802 = vunpack.c.l.b16 %v323
      %v803 = vunpack.c.l.b16 %v324
      %v804 = vunpack.c.l.b16 %v325
      %v805 = vunpack.c.l.b16 %v326
      %v806 = vunpack.c.l.b16 %v327
      %v807 = vunpack.c.l.b16 %v328
      %v808 = vunpack.c.l.b16 %v329
      %v809 = vunpack.c.l.b16 %v330
      %v810 = vunpack.c.l.b16 %v331
      %v811 = vunpack.c.l.b16 %v332
      %v812 = vunpack.c.l.b16 %v333
      %v813 = vunpack.c.l.b16 %v334
      %v814 = vunpack.c.l.b16 %v335
      %v815 = vunpack.c.l.b16 %v336
      %v816 = vunpack.c.l.b16 %v337
      %v817 = vunpack.c.l.b16 %v338
      %v818 = vunpack.c.l.b16 %v339
      %v819 = vunpack.c.l.b16 %v340
      %v820 = vunpack.c.l.b16 %v341
      %v821 = vunpack.c.l.b16 %v342
      %v822 = vunpack.c.l.b16 %v343
      %v823 = vunpack.c.l.b16 %v344
      %v824 = vunpack.c.l.b16 %v345
      %v825 = vunpack.c.l.b16 %v346
      %v826 = vunpack.c.l.b16 %v347
      %v827 = vunpack.c.l.b16 %v348
      %v828 = vunpack.c.l.b16 %v349
      %v829 = vunpack.c.l.b16 %v350
      %v830 = vunpack.c.l.b16 %v351
      %v831 = vunpack.c.l.b16 %v352
      %v832 = vunpack.c.l.b16 %v353
      %v833 = vunpack.c.l.b16 %v354
      %v834 = vunpack.c.l.b16 %v355
      %v835 = vunpack.c.l.b16 %v356
      %v836 = vunpack.c.l.b16 %v357
      %v837 = vunpack.c.l.b16 %v358
      %v838 = vunpack.c.l.b16 %v359
      %v839 = vunpack.c.l.b16 %v360
      %v840 = vunpack.c.l.b16 %v361
      %v841 = vunpack.c.l.b16 %v362
      %v842 = vunpack.c.l.b16 %v363
      %v843 = vunpack.c.l.b16 %v364
      %v844 = vunpack.c.l.b16 %v365
      %v845 = vunpack.c.l.b16 %v366
      %v846 = vunpack.c.l.b16 %v367
      %v847 = vunpack.c.l.b16 %v368
      %v848 = vunpack.c.l.b16 %v369
      %v849 = vunpack.c.l.b16 %v370
      %v850 = vunpack.c.l.b16 %v371
      %v851 = vunpack.c.l.b16 %v372
      %v852 = vunpack.c.l.b16 %v373
      %v853 = vunpack.c.l.b16 %v374
      %v854 = vunpack.c.l.b16 %v375
      %v855 = vunpack.c.l.b16 %v376
      %v856 = vunpack.c.l.b16 %v377
      %v857 = vunpack.c.l.b16 %v378
      %v858 = vunpack.c.l.b16 %v379
      %v859 = vunpack.c.l.b16 %v380
      %v860 = vunpack.c.l.b16 %v381
      %v861 = vunpack.c.l.b16 %v382
      %v862 = vunpack.c.l.b16 %v383
      %v863 = vunpack.c.l.b16 %v384
      %v864 = vunpack.c.l.b16 %v385
      %v865 = vunpack.c.l.b16 %v386
      %v866 = vunpack.c.l.b16 %v387
      %v867 = vunpack.c.l.b16 %v388
      %v868 = vunpack.c.l.b16 %v389
      %v869 = vunpack.c.l.b16 %v390
      %v870 = vunpack.c.l.b16 %v391
      %v871 = vunpack.c.l.b16 %v392
      %v872 = vunpack.c.l.b16 %v393
      %v873 = vunpack.c.l.b16 %v394
      %v874 = vunpack.c.l.b16 %v395
      %v875 = vunpack.c.l.b16 %v396
      %v876 = vunpack.c.l.b16 %v397
      %v877 = vpack.c.b16 %v734, %v733
      %v878 = vpack.c.b16 %v736, %v735
      %v879 = vpack.c.b16 %v738, %v737
      %v880 = vpack.c.b16 %v740, %v739
      %v881 = vpack.c.b16 %v742, %v741
      %v882 = vpack.c.b16 %v744, %v743
      %v883 = vpack.c.b16 %v746, %v745
      %v884 = vpack.c.b16 %v748, %v747
      %v885 = vpack.c.b16 %v750, %v749
      %v886 = vpack.c.b16 %v752, %v751
      %v887 = vpack.c.b16 %v754, %v753
      %v888 = vpack.c.b16 %v756, %v755
      %v889 = vpack.c.b16 %v758, %v757
      %v890 = vpack.c.b16 %v760, %v759
      %v891 = vpack.c.b16 %v762, %v761
      %v892 = vpack.c.b16 %v764, %v763
      %v893 = vpack.c.b16 %v766, %v765
      %v894 = vpack.c.b16 %v768, %v767
      %v895 = vpack.c.b16 %v770, %v769
      %v896 = vpack.c.b16 %v772, %v771
      %v897 = vpack.c.b16 %v774, %v773
      %v898 = vpack.c.b16 %v776, %v775
      %v899 = vpack.c.b16 %v778, %v777
      %v900 = vpack.c.b16 %v780, %v779
      %v901 = vpack.c.b16 %v782, %v781
      %v902 = vpack.c.b16 %v784, %v783
      %v903 = vpack.c.b16 %v786, %v785
      %v904 = vpack.c.b16 %v788, %v787
      %v905 = vpack.c.b16 %v790, %v789
      %v906 = vpack.c.b16 %v792, %v791
      %v907 = vpack.c.b16 %v794, %v793
      %v908 = vpack.c.b16 %v796, %v795
      %v909 = vpack.c.b16 %v798, %v797
      %v910 = vpack.c.b16 %v800, %v799
      %v911 = vpack.c.b16 %v802, %v801
      %v912 = vpack.c.b16 %v804, %v803
      %v913 = vpack.c.b16 %v806, %v805
      %v914 = vpack.c.b16 %v808, %v807
      %v915 = vpack.c.b16 %v810, %v809
      %v916 = vpack.c.b16 %v812, %v811
      %v917 = vpack.c.b16 %v814, %v813
      %v918 = vpack.c.b16 %v816, %v815
      %v919 = vpack.c.b16 %v818, %v817
      %v920 = vpack.c.b16 %v820, %v819
      %v921 = vpack.c.b16 %v822, %v821
      %v922 = vpack.c.b16 %v824, %v823
      %v923 = vpack.c.b16 %v826, %v825
      %v924 = vpack.c.b16 %v828, %v827
      %v925 = vpack.c.b16 %v830, %v829
      %v926 = vpack.c.b16 %v832, %v831
      %v927 = vpack.c.b16 %v834, %v833
      %v928 = vpack.c.b16 %v836, %v835
      %v929 = vpack.c.b16 %v838, %v837
      %v930 = vpack.c.b16 %v840, %v839
      %v931 = vpack.c.b16 %v842, %v841
      %v932 = vpack.c.b16 %v844, %v843
      %v933 = vpack.c.b16 %v846, %v845
      %v934 = vpack.c.b16 %v848, %v847
      %v935 = vpack.c.b16 %v850, %v849
      %v936 = vpack.c.b16 %v852, %v851
      %v937 = vpack.c.b16 %v854, %v853
      %v938 = vpack.c.b16 %v856, %v855
      %v939 = vpack.c.b16 %v858, %v857
      %v940 = vpack.c.b16 %v860, %v859
      %v941 = vpack.c.b16 %v862, %v861
      %v942 = vpack.c.b16 %v864, %v863
      %v943 = vpack.c.b16 %v866, %v865
      %v944 = vpack.c.b16 %v868, %v867
      %v945 = vpack.c.b16 %v870, %v869
      %v946 = vpack.c.b16 %v872, %v871
      %v947 = vpack.c.b16 %v874, %v873
      %v948 = vpack.c.b16 %v876, %v875
      %1021 = vmatprep.subr.bf16.mxu0 0
      %1022 = vmatpush1.bf16.msra.mxu0 %v877
      %1023 = vmatprep.subr.bf16.mxu0 0
      %1024 = vmatpush1.bf16.msra.mxu0 %v878
      %1025 = vmatprep.subr.bf16.mxu0 0
      %1026 = vmatpush1.bf16.msra.mxu0 %v879
      %1027 = vmatprep.subr.bf16.mxu0 0
      %1028 = vmatpush1.bf16.msra.mxu0 %v880
      %1029 = vmatprep.subr.bf16.mxu0 0
      %1030 = vmatpush1.bf16.msra.mxu0 %v881
      %1031 = vmatprep.subr.bf16.mxu0 0
      %1032 = vmatpush1.bf16.msra.mxu0 %v882
      %1033 = vmatprep.subr.bf16.mxu0 0
      %1034 = vmatpush1.bf16.msra.mxu0 %v883
      %1035 = vmatprep.subr.bf16.mxu0 0
      %1036 = vmatpush1.bf16.msra.mxu0 %v884
      %1037 = vmatprep.subr.bf16.mxu0 0
      %1038 = vmatpush1.bf16.msra.mxu0 %v885
      %1039 = vmatprep.subr.bf16.mxu0 0
      %1040 = vmatpush1.bf16.msra.mxu0 %v886
      %1041 = vmatprep.subr.bf16.mxu0 0
      %1042 = vmatpush1.bf16.msra.mxu0 %v887
      %1043 = vmatprep.subr.bf16.mxu0 0
      %1044 = vmatpush1.bf16.msra.mxu0 %v888
      %1045 = vmatprep.subr.bf16.mxu0 0
      %1046 = vmatpush1.bf16.msra.mxu0 %v889
      %1047 = vmatprep.subr.bf16.mxu0 0
      %1048 = vmatpush1.bf16.msra.mxu0 %v890
      %1049 = vmatprep.subr.bf16.mxu0 0
      %1050 = vmatpush1.bf16.msra.mxu0 %v891
      %1051 = vmatprep.subr.bf16.mxu0 0
      %1052 = vmatpush1.bf16.msra.mxu0 %v892
      %1053 = vmatprep.mubr.bf16.mxu0 %v518
      %1054 = vmatmul.mubr.bf16.gmra.mrb[0].mxu0 %v517
      %v1055 = vpop.f32.mrb[0].mxu0
      %v1056 = vadd.f32 %v403, %v1055
      %v1057 = vpop.f32.mrb[0].mxu0
      %v1058 = vpop.f32.mrb[0].mxu0
      %v1059 = vadd.f32 %v403, %v1058
      %v1060 = vpop.f32.mrb[0].mxu0
      %1061 = vmatprep.mubr.bf16.mxu0 %v527
      %1062 = vmatmul.mubr.bf16.gmra.mrb[0].mxu0 %v526
      %v1063 = vpop.f32.mrb[0].mxu0
      %v1064 = vadd.f32 %v403, %v1063
      %v1065 = vpop.f32.mrb[0].mxu0
      %v1066 = vpop.f32.mrb[0].mxu0
      %v1067 = vadd.f32 %v403, %v1066
      %v1068 = vpop.f32.mrb[0].mxu0
      %1069 = vmatprep.mubr.bf16.mxu0 %v536
      %1070 = vmatmul.mubr.bf16.gmra.mrb[0].mxu0 %v535
      %v1071 = vpop.f32.mrb[0].mxu0
      %v1072 = vadd.f32 %v403, %v1071
      %v1073 = vpop.f32.mrb[0].mxu0
      %v1074 = vpop.f32.mrb[0].mxu0
      %v1075 = vadd.f32 %v403, %v1074
      %v1076 = vpop.f32.mrb[0].mxu0
      %1077 = vmatprep.mubr.bf16.mxu0 %v545
      %1078 = vmatmul.mubr.bf16.gmra.mrb[0].mxu0 %v544
      %v1079 = vpop.f32.mrb[0].mxu0
      %v1080 = vadd.f32 %v403, %v1079
      %v1081 = vpop.f32.mrb[0].mxu0
      %v1082 = vpop.f32.mrb[0].mxu0
      %v1083 = vadd.f32 %v403, %v1082
      %v1084 = vpop.f32.mrb[0].mxu0
      %1085 = vdwg.mxu0
      %1086 = vmatprep.subr.bf16.mxu0 0
      %1087 = vmatpush1.bf16.msra.mxu0 %v893
      %1088 = vmatprep.subr.bf16.mxu0 0
      %1089 = vmatpush1.bf16.msra.mxu0 %v894
      %1090 = vmatprep.subr.bf16.mxu0 0
      %1091 = vmatpush1.bf16.msra.mxu0 %v895
      %1092 = vmatprep.subr.bf16.mxu0 0
      %1093 = vmatpush1.bf16.msra.mxu0 %v896
      %1094 = vmatprep.subr.bf16.mxu0 0
      %1095 = vmatpush1.bf16.msra.mxu0 %v897
      %1096 = vmatprep.subr.bf16.mxu0 0
      %1097 = vmatpush1.bf16.msra.mxu0 %v898
      %1098 = vmatprep.subr.bf16.mxu0 0
      %1099 = vmatpush1.bf16.msra.mxu0 %v899
      %1100 = vmatprep.subr.bf16.mxu0 0
      %1101 = vmatpush1.bf16.msra.mxu0 %v900
      %1102 = vmatprep.subr.bf16.mxu0 0
      %1103 = vmatpush1.bf16.msra.mxu0 %v901
      %1104 = vmatprep.subr.bf16.mxu0 0
      %1105 = vmatpush1.bf16.msra.mxu0 %v902
      %1106 = vmatprep.subr.bf16.mxu0 0
      %1107 = vmatpush1.bf16.msra.mxu0 %v903
      %1108 = vmatprep.subr.bf16.mxu0 0
      %1109 = vmatpush1.bf16.msra.mxu0 %v904
      %1110 = vmatprep.subr.bf16.mxu0 0
      %1111 = vmatpush1.bf16.msra.mxu0 %v905
      %1112 = vmatprep.subr.bf16.mxu0 0
      %1113 = vmatpush1.bf16.msra.mxu0 %v906
      %1114 = vmatprep.subr.bf16.mxu0 0
      %1115 = vmatpush1.bf16.msra.mxu0 %v907
      %1116 = vmatprep.subr.bf16.mxu0 0
      %1117 = vmatpush1.bf16.msra.mxu0 %v908
      %1118 = vmatprep.mubr.bf16.mxu0 %v520
      %1119 = vmatmul.mubr.bf16.gmra.mrb[0].mxu0 %v519
      %v1120 = vpop.f32.mrb[0].mxu0
      %v1121 = vadd.f32 %v1056, %v1120
      %v1122 = vpop.f32.mrb[0].mxu0
      %v1123 = vpop.f32.mrb[0].mxu0
      %v1124 = vadd.f32 %v1059, %v1123
      %v1125 = vpop.f32.mrb[0].mxu0
      %1126 = vmatprep.mubr.bf16.mxu0 %v529
      %1127 = vmatmul.mubr.bf16.gmra.mrb[0].mxu0 %v528
      %v1128 = vpop.f32.mrb[0].mxu0
      %v1129 = vadd.f32 %v1064, %v1128
      %v1130 = vpop.f32.mrb[0].mxu0
      %v1131 = vpop.f32.mrb[0].mxu0
      %v1132 = vadd.f32 %v1067, %v1131
      %v1133 = vpop.f32.mrb[0].mxu0
      %1134 = vmatprep.mubr.bf16.mxu0 %v538
      %1135 = vmatmul.mubr.bf16.gmra.mrb[0].mxu0 %v537
      %v1136 = vpop.f32.mrb[0].mxu0
      %v1137 = vadd.f32 %v1072, %v1136
      %v1138 = vpop.f32.mrb[0].mxu0
      %v1139 = vpop.f32.mrb[0].mxu0
      %v1140 = vadd.f32 %v1075, %v1139
      %v1141 = vpop.f32.mrb[0].mxu0
      %1142 = vmatprep.mubr.bf16.mxu0 %v547
      %1143 = vmatmul.mubr.bf16.gmra.mrb[0].mxu0 %v546
      %v1144 = vpop.f32.mrb[0].mxu0
      %v1145 = vadd.f32 %v1080, %v1144
      %v1146 = vpop.f32.mrb[0].mxu0
      %v1147 = vpop.f32.mrb[0].mxu0
      %v1148 = vadd.f32 %v1083, %v1147
      %v1149 = vpop.f32.mrb[0].mxu0
      %1150 = vdwg.mxu0
      %1151 = vmatprep.subr.bf16.mxu0 0
      %1152 = vmatpush1.bf16.msra.mxu0 %v909
      %1153 = vmatprep.subr.bf16.mxu0 0
      %1154 = vmatpush1.bf16.msra.mxu0 %v910
      %1155 = vmatprep.subr.bf16.mxu0 0
      %1156 = vmatpush1.bf16.msra.mxu0 %v911
      %1157 = vmatprep.subr.bf16.mxu0 0
      %1158 = vmatpush1.bf16.msra.mxu0 %v912
      %1159 = vmatprep.subr.bf16.mxu0 0
      %1160 = vmatpush1.bf16.msra.mxu0 %v913
      %1161 = vmatprep.subr.bf16.mxu0 0
      %1162 = vmatpush1.bf16.msra.mxu0 %v914
      %1163 = vmatprep.subr.bf16.mxu0 0
      %1164 = vmatpush1.bf16.msra.mxu0 %v915
      %1165 = vmatprep.subr.bf16.mxu0 0
      %1166 = vmatpush1.bf16.msra.mxu0 %v916
      %1167 = vmatprep.subr.bf16.mxu0 0
      %1168 = vmatpush1.bf16.msra.mxu0 %v917
      %1169 = vmatprep.subr.bf16.mxu0 0
      %1170 = vmatpush1.bf16.msra.mxu0 %v918
      %1171 = vmatprep.subr.bf16.mxu0 0
      %1172 = vmatpush1.bf16.msra.mxu0 %v919
      %1173 = vmatprep.subr.bf16.mxu0 0
      %1174 = vmatpush1.bf16.msra.mxu0 %v920
      %1175 = vmatprep.subr.bf16.mxu0 0
      %1176 = vmatpush1.bf16.msra.mxu0 %v921
      %1177 = vmatprep.subr.bf16.mxu0 0
      %1178 = vmatpush1.bf16.msra.mxu0 %v922
      %1179 = vmatprep.subr.bf16.mxu0 0
      %1180 = vmatpush1.bf16.msra.mxu0 %v923
      %1181 = vmatprep.subr.bf16.mxu0 0
      %1182 = vmatpush1.bf16.msra.mxu0 %v924
      %1183 = vmatprep.mubr.bf16.mxu0 %v522
      %1184 = vmatmul.mubr.bf16.gmra.mrb[0].mxu0 %v521
      %v1185 = vpop.f32.mrb[0].mxu0
      %v1186 = vadd.f32 %v1121, %v1185
      %v1187 = vpop.f32.mrb[0].mxu0
      %v1188 = vpop.f32.mrb[0].mxu0
      %v1189 = vadd.f32 %v1124, %v1188
      %v1190 = vpop.f32.mrb[0].mxu0
      %1191 = vmatprep.mubr.bf16.mxu0 %v531
      %1192 = vmatmul.mubr.bf16.gmra.mrb[0].mxu0 %v530
      %v1193 = vpop.f32.mrb[0].mxu0
      %v1194 = vadd.f32 %v1129, %v1193
      %v1195 = vpop.f32.mrb[0].mxu0
      %v1196 = vpop.f32.mrb[0].mxu0
      %v1197 = vadd.f32 %v1132, %v1196
      %v1198 = vpop.f32.mrb[0].mxu0
      %1199 = vmatprep.mubr.bf16.mxu0 %v540
      %1200 = vmatmul.mubr.bf16.gmra.mrb[0].mxu0 %v539
      %v1201 = vpop.f32.mrb[0].mxu0
      %v1202 = vadd.f32 %v1137, %v1201
      %v1203 = vpop.f32.mrb[0].mxu0
      %v1204 = vpop.f32.mrb[0].mxu0
      %v1205 = vadd.f32 %v1140, %v1204
      %v1206 = vpop.f32.mrb[0].mxu0
      %1207 = vmatprep.mubr.bf16.mxu0 %v549
      %1208 = vmatmul.mubr.bf16.gmra.mrb[0].mxu0 %v548
      %v1209 = vpop.f32.mrb[0].mxu0
      %v1210 = vadd.f32 %v1145, %v1209
      %v1211 = vpop.f32.mrb[0].mxu0
      %v1212 = vpop.f32.mrb[0].mxu0
      %v1213 = vadd.f32 %v1148, %v1212
      %v1214 = vpop.f32.mrb[0].mxu0
      %1215 = vdwg.mxu0
      %1216 = vmatprep.subr.bf16.mxu0 0
      %1217 = vmatpush1.bf16.msra.mxu0 %v925
      %1218 = vmatprep.subr.bf16.mxu0 0
      %1219 = vmatpush1.bf16.msra.mxu0 %v926
      %1220 = vmatprep.subr.bf16.mxu0 0
      %1221 = vmatpush1.bf16.msra.mxu0 %v927
      %1222 = vmatprep.subr.bf16.mxu0 0
      %1223 = vmatpush1.bf16.msra.mxu0 %v928
      %1224 = vmatprep.subr.bf16.mxu0 0
      %1225 = vmatpush1.bf16.msra.mxu0 %v929
      %1226 = vmatprep.subr.bf16.mxu0 0
      %1227 = vmatpush1.bf16.msra.mxu0 %v930
      %1228 = vmatprep.subr.bf16.mxu0 0
      %1229 = vmatpush1.bf16.msra.mxu0 %v931
      %1230 = vmatprep.subr.bf16.mxu0 0
      %1231 = vmatpush1.bf16.msra.mxu0 %v932
      %1232 = vmatprep.subr.bf16.mxu0 0
      %1233 = vmatpush1.bf16.msra.mxu0 %v933
      %1234 = vmatprep.subr.bf16.mxu0 0
      %1235 = vmatpush1.bf16.msra.mxu0 %v934
      %1236 = vmatprep.subr.bf16.mxu0 0
      %1237 = vmatpush1.bf16.msra.mxu0 %v935
      %1238 = vmatprep.subr.bf16.mxu0 0
      %1239 = vmatpush1.bf16.msra.mxu0 %v936
      %1240 = vmatprep.subr.bf16.mxu0 0
      %1241 = vmatpush1.bf16.msra.mxu0 %v937
      %1242 = vmatprep.subr.bf16.mxu0 0
      %1243 = vmatpush1.bf16.msra.mxu0 %v938
      %1244 = vmatprep.subr.bf16.mxu0 0
      %1245 = vmatpush1.bf16.msra.mxu0 %v939
      %1246 = vmatprep.subr.bf16.mxu0 0
      %1247 = vmatpush1.bf16.msra.mxu0 %v940
      %1248 = vmatprep.mubr.bf16.mxu0 %v524
      %1249 = vmatmul.mubr.bf16.gmra.mrb[0].mxu0 %v523
      %v1250 = vpop.f32.mrb[0].mxu0
      %v1251 = vadd.f32 %v1186, %v1250
      %v1252 = vpop.f32.mrb[0].mxu0
      %v1253 = vpop.f32.mrb[0].mxu0
      %v1254 = vadd.f32 %v1189, %v1253
      %v1255 = vpop.f32.mrb[0].mxu0
      %1256 = vmatprep.mubr.bf16.mxu0 %v533
      %1257 = vmatmul.mubr.bf16.gmra.mrb[0].mxu0 %v532
      %v1258 = vpop.f32.mrb[0].mxu0
      %v1259 = vadd.f32 %v1194, %v1258
      %v1260 = vpop.f32.mrb[0].mxu0
      %v1261 = vpop.f32.mrb[0].mxu0
      %v1262 = vadd.f32 %v1197, %v1261
      %v1263 = vpop.f32.mrb[0].mxu0
      %1264 = vmatprep.mubr.bf16.mxu0 %v542
      %1265 = vmatmul.mubr.bf16.gmra.mrb[0].mxu0 %v541
      %v1266 = vpop.f32.mrb[0].mxu0
      %v1267 = vadd.f32 %v1202, %v1266
      %v1268 = vpop.f32.mrb[0].mxu0
      %v1269 = vpop.f32.mrb[0].mxu0
      %v1270 = vadd.f32 %v1205, %v1269
      %v1271 = vpop.f32.mrb[0].mxu0
      %1272 = vmatprep.mubr.bf16.mxu0 %v551
      %1273 = vmatmul.mubr.bf16.gmra.mrb[0].mxu0 %v550
      %v1274 = vpop.f32.mrb[0].mxu0
      %v1275 = vadd.f32 %v1210, %v1274
      %v1276 = vpop.f32.mrb[0].mxu0
      %v1277 = vpop.f32.mrb[0].mxu0
      %v1278 = vadd.f32 %v1213, %v1277
      %v1279 = vpop.f32.mrb[0].mxu0
      %1280 = vdwg.mxu0
      %1281 = vmatprep.subr.bf16.mxu0 0
      %1282 = vmatpush1.bf16.msra.mxu0 %v941
      %1283 = vmatprep.subr.bf16.mxu0 0
      %1284 = vmatpush1.bf16.msra.mxu0 %v942
      %1285 = vmatprep.subr.bf16.mxu0 0
      %1286 = vmatpush1.bf16.msra.mxu0 %v943
      %1287 = vmatprep.subr.bf16.mxu0 0
      %1288 = vmatpush1.bf16.msra.mxu0 %v944
      %1289 = vmatprep.subr.bf16.mxu0 0
      %1290 = vmatpush1.bf16.msra.mxu0 %v945
      %1291 = vmatprep.subr.bf16.mxu0 0
      %1292 = vmatpush1.bf16.msra.mxu0 %v946
      %1293 = vmatprep.subr.bf16.mxu0 0
      %1294 = vmatpush1.bf16.msra.mxu0 %v947
      %1295 = vmatprep.subr.bf16.mxu0 0
      %1296 = vmatpush1.bf16.msra.mxu0 %v948
      %1297 = vmatprep.subr.bf16.mxu0 0
      %1298 = vmatpush1.bf16.msra.mxu0 0
      %1299 = vmatprep.subr.bf16.mxu0 0
      %1300 = vmatpush1.bf16.msra.mxu0 0
      %1301 = vmatprep.subr.bf16.mxu0 0
      %1302 = vmatpush1.bf16.msra.mxu0 0
      %1303 = vmatprep.subr.bf16.mxu0 0
      %1304 = vmatpush1.bf16.msra.mxu0 0
      %1305 = vmatprep.subr.bf16.mxu0 0
      %1306 = vmatpush1.bf16.msra.mxu0 0
      %1307 = vmatprep.subr.bf16.mxu0 0
      %1308 = vmatpush1.bf16.msra.mxu0 0
      %1309 = vmatprep.subr.bf16.mxu0 0
      %1310 = vmatpush1.bf16.msra.mxu0 0
      %1311 = vmatprep.subr.bf16.mxu0 0
      %1312 = vmatpush1.bf16.msra.mxu0 0
      %1313 = vmatprep.mubr.bf16.mxu0 0
      %1314 = vmatmul.mubr.bf16.gmra.mrb[0].mxu0 %v525
      %v1315 = vpop.f32.mrb[0].mxu0
      %v1316 = vadd.f32 %v1251, %v1315
      %v1317 = vpop.f32.mrb[0].mxu0
      %v1318 = vpop.f32.mrb[0].mxu0
      %v1319 = vadd.f32 %v1254, %v1318
      %v1320 = vpop.f32.mrb[0].mxu0
      %1321 = vmatprep.mubr.bf16.mxu0 0
      %1322 = vmatmul.mubr.bf16.gmra.mrb[0].mxu0 %v534
      %v1323 = vpop.f32.mrb[0].mxu0
      %v1324 = vadd.f32 %v1259, %v1323
      %v1325 = vpop.f32.mrb[0].mxu0
      %v1326 = vpop.f32.mrb[0].mxu0
      %v1327 = vadd.f32 %v1262, %v1326
      %v1328 = vpop.f32.mrb[0].mxu0
      %1329 = vmatprep.mubr.bf16.mxu0 0
      %1330 = vmatmul.mubr.bf16.gmra.mrb[0].mxu0 %v543
      %v1331 = vpop.f32.mrb[0].mxu0
      %v1332 = vadd.f32 %v1267, %v1331
      %v1333 = vpop.f32.mrb[0].mxu0
      %v1334 = vpop.f32.mrb[0].mxu0
      %v1335 = vadd.f32 %v1270, %v1334
      %v1336 = vpop.f32.mrb[0].mxu0
      %1337 = vmatprep.mubr.bf16.mxu0 0
      %1338 = vmatmul.mubr.bf16.gmra.mrb[0].mxu0 %v552
      %v1339 = vpop.f32.mrb[0].mxu0
      %v1340 = vadd.f32 %v1275, %v1339
      %v1341 = vpop.f32.mrb[0].mxu0
      %v1342 = vpop.f32.mrb[0].mxu0
      %v1343 = vadd.f32 %v1278, %v1342
      %v1344 = vpop.f32.mrb[0].mxu0
      %1345 = vdwg.mxu0
      %v1346 = vmax.f32 %v1316, 0.0
      %v1347 = vmax.f32 %v1319, 0.0
      %v1348 = vmax.f32 %v1324, 0.0
      %v1349 = vmax.f32 %v1327, 0.0
      %v1350 = vmax.f32 %v1332, 0.0
      %v1351 = vmax.f32 %v1335, 0.0
      %v1352 = vmax.f32 %v1340, 0.0
      %v1353 = vmax.f32 %v1343, 0.0
      %v1354 = vpack.c.bf16 %v1347, %v1346
      %v1355 = vpack.c.bf16 %v1349, %v1348
      %v1356 = vpack.c.bf16 %v1351, %v1350
      %v1357 = vpack.c.bf16 %v1353, %v1352
      %v1362 = vunpack.c.l.b16 %v1354
      %v1363 = vunpack.c.h.b16 %v1354
      %v1364 = vunpack.c.l.b16 %v1355
      %v1365 = vunpack.c.h.b16 %v1355
      %v1366 = vunpack.c.l.b16 %v1356
      %v1367 = vunpack.c.h.b16 %v1356
      %v1368 = vunpack.c.l.b16 %v1357
      %v1369 = vunpack.c.h.b16 %v1357
      %v1370 = vpack.c.b16 %v1362, %v1362
      %v1371 = vpack.c.b16 %v1363, %v1363
      %v1372 = vpack.c.b16 %v1364, %v1364
      %v1373 = vpack.c.b16 %v1365, %v1365
      %v1374 = vpack.c.b16 %v1366, %v1366
      %v1375 = vpack.c.b16 %v1367, %v1367
      %v1376 = vpack.c.b16 %v1368, %v1368
      %v1377 = vpack.c.b16 %v1369, %v1369
      %1386 = vst [vmem:[%s211] sm:$0xf] %v1370
      %1387 = vst [vmem:[%s211 + $0x4] sm:$0xf] %v1371
      %1388 = vst [vmem:[%s211 + $0x8] sm:$0xf] %v1372
      %1389 = vst [vmem:[%s211 + $0xc] sm:$0xf] %v1373
      %1390 = vst [vmem:[%s211 + $0x10] sm:$0xf] %v1374
      %1391 = vst [vmem:[%s211 + $0x14] sm:$0xf] %v1375
      %1392 = vst [vmem:[%s211 + $0x18] sm:$0xf] %v1376
      %1393 = vst [vmem:[%s211 + $0x1c] sm:$0xf] %v1377
      %s1394 = smul.u32 8, %s19
      %p1395 = scmp.lt.s32.totalorder %s18, 1
      %s1396 = scalar_select %p1395, %s18, 1
      %p1397 = scmp.lt.s32.totalorder %s1394, 7
      %s1398 = scalar_select %p1397, %s1394, 7
      %s1399 = smul.addr %s1396, 8
      %s1400 = sadd.s32 %s1398, %s1399
      %s1401 = smul.addr %s1400, 4
      %s1402 = scalar_lea.vmem %s3, %s1401
      // Predicated region
      $region33: #{basic_block_pallas.2} parent=31 // pred_check
        %p1403 = pneg %p116
      $region34: #{basic_block_pallas.2} parent=31 // pred_check_branch
        %1405 = sbr.rel (%p1403) target = $region36
      $region35: #{basic_block_pallas.2} parent=31 // pred_region
        %s1406 = smul.u32 8, %s19
      $region36: #{basic_block_pallas.2} parent=31 // pred_fallthru
        _
    $region32: #{basic_block_pallas.2} parent=5 // pred_fallthru
      _
    %p1407 = scmp.le.s32.totalorder 2, %s9
    // Predicated region
    $region37: #{basic_block_pallas.2} parent=5 // pred_check
      %p1408 = pneg %p1407
    $region38: #{basic_block_pallas.2} parent=5 // pred_check_branch
      %1410 = sbr.rel (%p1408) target = $region40
    $region39: #{basic_block_pallas.2} parent=5 // pred_region
      %s1411 = ssub.s32 %s9, 2
      // Predicated region
      $region41: #{basic_block_pallas.2} parent=39 // pred_check
        %p1412 = pneg %p122
      $region42: #{basic_block_pallas.2} parent=39 // pred_check_branch
        %1414 = sbr.rel (%p1412) target = $region44
      $region43: #{basic_block_pallas.2} parent=39 // pred_region
        %s1415 = smul.u32 8, %s21
        %p1416 = scmp.lt.s32.totalorder %s20, 1
        %s1417 = scalar_select %p1416, %s20, 1
        %p1418 = scmp.lt.s32.totalorder %s1415, 7
        %s1419 = scalar_select %p1418, %s1415, 7
        %s1420 = smul.addr %s1417, 8
        %s1421 = sadd.s32 %s1419, %s1420
        %s1422 = smul.addr %s1421, 4
        %s1423 = scalar_lea.vmem %s3, %s1422
      $region44: #{basic_block_pallas.2} parent=39 // pred_fallthru
        _
    $region40: #{basic_block_pallas.2} parent=5 // pred_fallthru
      _
  $region6: #{basic_block_pallas.2} parent=0 // loop_footer
    %s13 = sadd.s32 1, %s9
  $region7: #{basic_block_pallas.2} parent=0 // loop_footer_branch
    %8 = sbr.rel target = $region3
  $region8: #{basic_block_pallas.2} parent=0 // loop_exit
    _

// kernel: basic_block_pallas.3
$region0: #{basic_block_pallas.3}
  #allocation0 [shape = 'u32[]', space=smem, size = 0x4, offset = 0x4, fixed_abs, tag = 'smem constant byte address 0x4 - core index']
  #allocation1 [shape = 'u32[144,128]{1,0:T(1,128)}', space=vmem, size = 0x12000, scoped, tag = 'internal scratch']
  %s0 = inlined_call_operand.vmem [shape: bf16[2,64,1152], index: 0, kind: input, shape index: {}]
  %s1 = inlined_call_operand.vmem [shape: bf16[1152,128], index: 1, kind: input, shape index: {}]
  %s2 = inlined_call_operand.vmem [shape: f32[1,128], index: 2, kind: input, shape index: {}]
  %s3 = inlined_call_operand.vmem [shape: bf16[2,64,128], index: 3, kind: input, shape index: {}]
  %s4 = inlined_call_operand.vmem [shape: bf16[128,128], index: 4, kind: input, shape index: {}]
  %s5 = inlined_call_operand.vmem [shape: f32[1,128], index: 5, kind: input, shape index: {}]
  %s6 = inlined_call_operand.vmem [shape: f32[2,64,128], index: 6, kind: output, shape index: {}]
  %s7 = sld [smem:[#allocation0]]
  $region57: #{basic_block_pallas.3} parent=0
    _
  %s9 = ssub.s32 1, %s7
  %s10 = scalar_select 0, %s9, %s7
  loop: start=0, step=1, limit=4
  $region2: #{basic_block_pallas.3} parent=0 // loop_pre_header
    _
  $region3: #{basic_block_pallas.3} parent=0 // loop_header
    %s12 = sphi 0, %s16
    %p13 = scmp.ge.s32.totalorder %s12, 4
    %s19 = sphi 0, %s31
    %s20 = sphi 0, %s27
    %s21 = sphi 0, %s19
    %s22 = sphi 0, %s20
    %s23 = sphi 0, %s21
    %s24 = sphi 0, %s22
    %s36 = sphi 0, %s38
    %s39 = sphi 0, %s36
    %s40 = sphi 0, %s39
    %s56 = sphi 0, %s40
    %s60 = sphi 0, %s60
    %s62 = sphi 0, %s60
    %s63 = sphi 0, %s62
    %s77 = sphi 0, %s63
    %s81 = sphi 0, %s81
    %s83 = sphi 0, %s81
    %s84 = sphi 0, %s83
    %s98 = sphi 0, %s84
    %s106 = sphi 0, %s108
    %s109 = sphi 0, %s106
    %s110 = sphi 0, %s109
    %s126 = sphi 0, %s110
    %s130 = sphi 0, %s130
    %s132 = sphi 0, %s130
    %s133 = sphi 0, %s132
    %s147 = sphi 0, %s133
    %s151 = sphi 0, %s151
    %s153 = sphi 0, %s151
    %s154 = sphi 0, %s153
    %s168 = sphi 0, %s154
    %s176 = sphi 0, %s178
    %s179 = sphi 0, %s176
    %s180 = sphi 0, %s179
    %s196 = sphi 0, %s180
  $region4: #{basic_block_pallas.3} parent=0 // loop_header_branch
    %15 = sbr.rel (%p13) target = $region8
  $region5: #{basic_block_pallas.3} parent=0 // loop_body
    %s17 = ssub.s32 %s12, 1
    %s18 = ssub.s32 %s12, 2
    %s25 = sadd.s32 1, %s20
    %p26 = scmp.ge.s32.totalorder %s25, 1
    %s27 = scalar_select %p26, 0, %s25
    %s28 = sadd.s32 1, %s19
    %s29 = scalar_select %p26, %s28, %s19
    %p30 = scmp.ge.s32.totalorder %s29, 2
    %s31 = scalar_select %p30, 0, %s29
    %s32 = ssub.s32 %s19, %s31
    %s33 = ssub.s32 %s20, %s27
    %s34 = sor.u32 %s32, %s33
    %p35 = scmp.eq.s32.totalorder %s34, 0
    %s37 = sadd.s32 %s36, 1
    %s38 = scalar_select %p35, %s36, %s37
    %p41 = pneg %p35
    %p42 = scmp.eq.s32.totalorder %s12, 1
    %p43 = por %p41, %p42
    %p44 = scmp.ne.s32.totalorder %s36, %s39
    %p45 = scmp.eq.s32.totalorder %s12, 0
    %p46 = por %p44, %p45
    %p47 = scmp.ne.s32.totalorder %s36, %s39
    %p48 = scmp.eq.s32.totalorder %s17, 1
    %p49 = por %p47, %p48
    %p50 = scmp.ne.s32.totalorder %s39, %s40
    %p51 = scmp.eq.s32.totalorder %s17, 0
    %p52 = por %p50, %p51
    %p53 = scmp.ne.s32.totalorder %s39, %s40
    %p54 = scmp.eq.s32.totalorder %s18, 1
    %p55 = por %p53, %p54
    %p57 = scmp.ne.s32.totalorder %s40, %s56
    %p58 = scmp.eq.s32.totalorder %s18, 0
    %p59 = por %p57, %p58
    %s61 = sadd.s32 %s60, 1
    %p64 = scmp.eq.s32.totalorder %s12, 1
    %p65 = scmp.ne.s32.totalorder %s60, %s62
    %p66 = scmp.eq.s32.totalorder %s12, 0
    %p67 = por %p65, %p66
    %p68 = scmp.ne.s32.totalorder %s60, %s62
    %p69 = scmp.eq.s32.totalorder %s17, 1
    %p70 = por %p68, %p69
    %p71 = scmp.ne.s32.totalorder %s62, %s63
    %p72 = scmp.eq.s32.totalorder %s17, 0
    %p73 = por %p71, %p72
    %p74 = scmp.ne.s32.totalorder %s62, %s63
    %p75 = scmp.eq.s32.totalorder %s18, 1
    %p76 = por %p74, %p75
    %p78 = scmp.ne.s32.totalorder %s63, %s77
    %p79 = scmp.eq.s32.totalorder %s18, 0
    %p80 = por %p78, %p79
    %s82 = sadd.s32 %s81, 1
    %p85 = scmp.eq.s32.totalorder %s12, 1
    %p86 = scmp.ne.s32.totalorder %s81, %s83
    %p87 = scmp.eq.s32.totalorder %s12, 0
    %p88 = por %p86, %p87
    %p89 = scmp.ne.s32.totalorder %s81, %s83
    %p90 = scmp.eq.s32.totalorder %s17, 1
    %p91 = por %p89, %p90
    %p92 = scmp.ne.s32.totalorder %s83, %s84
    %p93 = scmp.eq.s32.totalorder %s17, 0
    %p94 = por %p92, %p93
    %p95 = scmp.ne.s32.totalorder %s83, %s84
    %p96 = scmp.eq.s32.totalorder %s18, 1
    %p97 = por %p95, %p96
    %p99 = scmp.ne.s32.totalorder %s84, %s98
    %p100 = scmp.eq.s32.totalorder %s18, 0
    %p101 = por %p99, %p100
    %s102 = ssub.s32 %s19, %s31
    %s103 = ssub.s32 %s20, %s27
    %s104 = sor.u32 %s102, %s103
    %p105 = scmp.eq.s32.totalorder %s104, 0
    %s107 = sadd.s32 %s106, 1
    %s108 = scalar_select %p105, %s106, %s107
    %p111 = pneg %p105
    %p112 = scmp.eq.s32.totalorder %s12, 1
    %p113 = por %p111, %p112
    %p114 = scmp.ne.s32.totalorder %s106, %s109
    %p115 = scmp.eq.s32.totalorder %s12, 0
    %p116 = por %p114, %p115
    %p117 = scmp.ne.s32.totalorder %s106, %s109
    %p118 = scmp.eq.s32.totalorder %s17, 1
    %p119 = por %p117, %p118
    %p120 = scmp.ne.s32.totalorder %s109, %s110
    %p121 = scmp.eq.s32.totalorder %s17, 0
    %p122 = por %p120, %p121
    %p123 = scmp.ne.s32.totalorder %s109, %s110
    %p124 = scmp.eq.s32.totalorder %s18, 1
    %p125 = por %p123, %p124
    %p127 = scmp.ne.s32.totalorder %s110, %s126
    %p128 = scmp.eq.s32.totalorder %s18, 0
    %p129 = por %p127, %p128
    %s131 = sadd.s32 %s130, 1
    %p134 = scmp.eq.s32.totalorder %s12, 1
    %p135 = scmp.ne.s32.totalorder %s130, %s132
    %p136 = scmp.eq.s32.totalorder %s12, 0
    %p137 = por %p135, %p136
    %p138 = scmp.ne.s32.totalorder %s130, %s132
    %p139 = scmp.eq.s32.totalorder %s17, 1
    %p140 = por %p138, %p139
    %p141 = scmp.ne.s32.totalorder %s132, %s133
    %p142 = scmp.eq.s32.totalorder %s17, 0
    %p143 = por %p141, %p142
    %p144 = scmp.ne.s32.totalorder %s132, %s133
    %p145 = scmp.eq.s32.totalorder %s18, 1
    %p146 = por %p144, %p145
    %p148 = scmp.ne.s32.totalorder %s133, %s147
    %p149 = scmp.eq.s32.totalorder %s18, 0
    %p150 = por %p148, %p149
    %s152 = sadd.s32 %s151, 1
    %p155 = scmp.eq.s32.totalorder %s12, 1
    %p156 = scmp.ne.s32.totalorder %s151, %s153
    %p157 = scmp.eq.s32.totalorder %s12, 0
    %p158 = por %p156, %p157
    %p159 = scmp.ne.s32.totalorder %s151, %s153
    %p160 = scmp.eq.s32.totalorder %s17, 1
    %p161 = por %p159, %p160
    %p162 = scmp.ne.s32.totalorder %s153, %s154
    %p163 = scmp.eq.s32.totalorder %s17, 0
    %p164 = por %p162, %p163
    %p165 = scmp.ne.s32.totalorder %s153, %s154
    %p166 = scmp.eq.s32.totalorder %s18, 1
    %p167 = por %p165, %p166
    %p169 = scmp.ne.s32.totalorder %s154, %s168
    %p170 = scmp.eq.s32.totalorder %s18, 0
    %p171 = por %p169, %p170
    %s172 = ssub.s32 %s19, %s31
    %s173 = ssub.s32 %s20, %s27
    %s174 = sor.u32 %s172, %s173
    %p175 = scmp.eq.s32.totalorder %s174, 0
    %s177 = sadd.s32 %s176, 1
    %s178 = scalar_select %p175, %s176, %s177
    %p181 = pneg %p175
    %p182 = scmp.eq.s32.totalorder %s12, 1
    %p183 = por %p181, %p182
    %p184 = scmp.ne.s32.totalorder %s176, %s179
    %p185 = scmp.eq.s32.totalorder %s12, 0
    %p186 = por %p184, %p185
    %p187 = scmp.ne.s32.totalorder %s176, %s179
    %p188 = scmp.eq.s32.totalorder %s17, 1
    %p189 = por %p187, %p188
    %p190 = scmp.ne.s32.totalorder %s179, %s180
    %p191 = scmp.eq.s32.totalorder %s17, 0
    %p192 = por %p190, %p191
    %p193 = scmp.ne.s32.totalorder %s179, %s180
    %p194 = scmp.eq.s32.totalorder %s18, 1
    %p195 = por %p193, %p194
    %p197 = scmp.ne.s32.totalorder %s180, %s196
    %p198 = scmp.eq.s32.totalorder %s18, 0
    %p199 = por %p197, %p198
    %p200 = scmp.le.s32.totalorder 1, %s12
    %p201 = scmp.lt.s32.totalorder %s12, 3
    %p202 = pnand %p200, %p201
    %p203 = pneg %p202
    // Predicated region
    $region9: #{basic_block_pallas.3} parent=5 // pred_check
      _
    $region10: #{basic_block_pallas.3} parent=5 // pred_check_branch
      %205 = sbr.rel (%p202) target = $region12
    $region11: #{basic_block_pallas.3} parent=5 // pred_region
      %s206 = ssub.s32 %s12, 1
      // Predicated region
      $region13: #{basic_block_pallas.3} parent=11 // pred_check
        %p207 = pneg %p73
      $region14: #{basic_block_pallas.3} parent=11 // pred_check_branch
        %209 = sbr.rel (%p207) target = $region16
      $region15: #{basic_block_pallas.3} parent=11 // pred_region
        _
      $region16: #{basic_block_pallas.3} parent=11 // pred_fallthru
        _
      // Predicated region
      $region17: #{basic_block_pallas.3} parent=11 // pred_check
        %p210 = pneg %p94
      $region18: #{basic_block_pallas.3} parent=11 // pred_check_branch
        %212 = sbr.rel (%p210) target = $region20
      $region19: #{basic_block_pallas.3} parent=11 // pred_region
        _
      $region20: #{basic_block_pallas.3} parent=11 // pred_fallthru
        _
      // Predicated region
      $region21: #{basic_block_pallas.3} parent=11 // pred_check
        %p213 = pneg %p143
      $region22: #{basic_block_pallas.3} parent=11 // pred_check_branch
        %215 = sbr.rel (%p213) target = $region24
      $region23: #{basic_block_pallas.3} parent=11 // pred_region
        _
      $region24: #{basic_block_pallas.3} parent=11 // pred_fallthru
        _
      // Predicated region
      $region25: #{basic_block_pallas.3} parent=11 // pred_check
        %p216 = pneg %p164
      $region26: #{basic_block_pallas.3} parent=11 // pred_check_branch
        %218 = sbr.rel (%p216) target = $region28
      $region27: #{basic_block_pallas.3} parent=11 // pred_region
        _
      $region28: #{basic_block_pallas.3} parent=11 // pred_fallthru
        _
    $region12: #{basic_block_pallas.3} parent=5 // pred_fallthru
      _
    %p219 = scmp.lt.s32.totalorder %s12, 2
    // Predicated region
    $region29: #{basic_block_pallas.3} parent=5 // pred_check
      %p220 = pneg %p219
    $region30: #{basic_block_pallas.3} parent=5 // pred_check_branch
      %222 = sbr.rel (%p220) target = $region32
    $region31: #{basic_block_pallas.3} parent=5 // pred_region
      // Predicated region
      $region33: #{basic_block_pallas.3} parent=31 // pred_check
        %p223 = pneg %p46
      $region34: #{basic_block_pallas.3} parent=31 // pred_check_branch
        %225 = sbr.rel (%p223) target = $region36
      $region35: #{basic_block_pallas.3} parent=31 // pred_region
        %s226 = smul.u32 8, %s20
        %p227 = scmp.lt.s32.totalorder %s19, 1
        %s228 = scalar_select %p227, %s19, 1
        %p229 = scmp.lt.s32.totalorder %s226, 7
        %s230 = scalar_select %p229, %s226, 7
        %s231 = smul.addr %s230, 9
        %s232 = smul.addr %s228, 72
        %s233 = sadd.s32 %s231, %s232
        %s234 = smul.addr %s233, 4
        %s235 = scalar_lea.vmem %s0, %s234
        %s236 = smul.u32 8, %s20
      $region36: #{basic_block_pallas.3} parent=31 // pred_fallthru
        _
      // Predicated region
      $region37: #{basic_block_pallas.3} parent=31 // pred_check
        %p237 = pneg %p116
      $region38: #{basic_block_pallas.3} parent=31 // pred_check_branch
        %239 = sbr.rel (%p237) target = $region40
      $region39: #{basic_block_pallas.3} parent=31 // pred_region
        %s240 = smul.u32 8, %s20
        %p241 = scmp.lt.s32.totalorder %s19, 1
        %s242 = scalar_select %p241, %s19, 1
        %p243 = scmp.lt.s32.totalorder %s240, 7
        %s244 = scalar_select %p243, %s240, 7
        %s245 = smul.addr %s242, 8
        %s246 = sadd.s32 %s244, %s245
        %s247 = smul.addr %s246, 4
        %s248 = scalar_lea.vmem %s3, %s247
        %s249 = smul.u32 8, %s20
      $region40: #{basic_block_pallas.3} parent=31 // pred_fallthru
        _
    $region32: #{basic_block_pallas.3} parent=5 // pred_fallthru
      _
    %p250 = scmp.le.s32.totalorder 1, %s12
    %p251 = scmp.lt.s32.totalorder %s12, 3
    %p252 = pnand %p250, %p251
    %p253 = pneg %p252
    // Predicated region
    $region41: #{basic_block_pallas.3} parent=5 // pred_check
      _
    $region42: #{basic_block_pallas.3} parent=5 // pred_check_branch
      %255 = sbr.rel (%p252) target = $region44
    $region43: #{basic_block_pallas.3} parent=5 // pred_region
      %s256 = ssub.s32 %s12, 1
      %s257 = smul.u32 8, %s22
      %p258 = scmp.lt.s32.totalorder %s21, 1
      %s259 = scalar_select %p258, %s21, 1
      %p260 = scmp.lt.s32.totalorder %s257, 7
      %s261 = scalar_select %p260, %s257, 7
      %s262 = smul.addr %s261, 9
      %s263 = smul.addr %s259, 72
      %s264 = sadd.s32 %s262, %s263
      %s265 = smul.addr %s264, 4
      %s266 = scalar_lea.vmem %s0, %s265
      %p267 = pneg %p52
      %p268 = pneg %p49
      %p269 = pneg %p73
      %p270 = pneg %p70
      %p271 = pneg %p94
      %p272 = pneg %p91
      %s273 = smul.u32 8, %s22
      %p274 = scmp.lt.s32.totalorder %s21, 1
      %s275 = scalar_select %p274, %s21, 1
      %p276 = scmp.lt.s32.totalorder %s273, 7
      %s277 = scalar_select %p276, %s273, 7
      %s278 = smul.addr %s275, 8
      %s279 = sadd.s32 %s277, %s278
      %s280 = smul.addr %s279, 4
      %s281 = scalar_lea.vmem %s3, %s280
      %p282 = pneg %p122
      %p283 = pneg %p119
      %p284 = pneg %p143
      %p285 = pneg %p140
      %p286 = pneg %p164
      %p287 = pneg %p161
      %p288 = pneg %p192
      %p289 = pneg %p189
      %s290 = smul.u32 8, %s22
      %p291 = scmp.lt.s32.totalorder %s21, 1
      %s292 = scalar_select %p291, %s21, 1
      %p293 = scmp.lt.s32.totalorder %s290, 7
      %s294 = scalar_select %p293, %s290, 7
      %s295 = smul.addr %s292, 8
      %s296 = sadd.s32 %s294, %s295
      %s297 = smul.addr %s296, 8
      %s298 = scalar_lea.vmem %s6, %s297
      %s299 = smul.u32 8, %s22
      %p300 = scmp.lt.s32.totalorder %s21, 1
      %s301 = scalar_select %p300, %s21, 1
      %p302 = scmp.lt.s32.totalorder %s299, 7
      %s303 = scalar_select %p302, %s299, 7
      %s304 = smul.addr %s303, 9
      %s305 = smul.addr %s301, 72
      %s306 = sadd.s32 %s304, %s305
      %s307 = smul.addr %s306, 4
      %s308 = scalar_lea.vmem %s0, %s307
      %s309 = smul.u32 8, %s22
      %s310 = smul.u32 8, %s22
      %p311 = scmp.lt.s32.totalorder %s21, 1
      %s312 = scalar_select %p311, %s21, 1
      %p313 = scmp.lt.s32.totalorder %s310, 7
      %s314 = scalar_select %p313, %s310, 7
      %s315 = smul.addr %s312, 8
      %s316 = sadd.s32 %s314, %s315
      %s317 = smul.addr %s316, 4
      %s318 = scalar_lea.vmem %s3, %s317
      %s319 = smul.u32 8, %s22
      %s320 = smul.u32 8, %s22
      %p321 = scmp.lt.s32.totalorder %s21, 1
      %s322 = scalar_select %p321, %s21, 1
      %p323 = scmp.lt.s32.totalorder %s320, 7
      %s324 = scalar_select %p323, %s320, 7
      %s325 = smul.addr %s322, 8
      %s326 = sadd.s32 %s324, %s325
      %s327 = smul.addr %s326, 8
      %s328 = scalar_lea.vmem %s6, %s327
      %s329 = smul.u32 8, %s22
      %v331 = vld [vmem:[%s308] sm:$0xff]
      %v332 = vld [vmem:[%s308 + $0x8] sm:$0xff]
      %v333 = vld [vmem:[%s308 + $0x10] sm:$0xff]
      %v334 = vld [vmem:[%s308 + $0x18] sm:$0xff]
      %v335 = vld [vmem:[%s308 + $0x20] sm:$0xf]
      %v336 = vld [vmem:[%s308 + $0x24] sm:$0xff]
      %v337 = vld [vmem:[%s308 + $0x2c] sm:$0xff]
      %v338 = vld [vmem:[%s308 + $0x34] sm:$0xff]
      %v339 = vld [vmem:[%s308 + $0x3c] sm:$0xff]
      %v340 = vld [vmem:[%s308 + $0x44] sm:$0xf]
      %v341 = vld [vmem:[%s308 + $0x48] sm:$0xff]
      %v342 = vld [vmem:[%s308 + $0x50] sm:$0xff]
      %v343 = vld [vmem:[%s308 + $0x58] sm:$0xff]
      %v344 = vld [vmem:[%s308 + $0x60] sm:$0xff]
      %v345 = vld [vmem:[%s308 + $0x68] sm:$0xf]
      %v346 = vld [vmem:[%s308 + $0x6c] sm:$0xff]
      %v347 = vld [vmem:[%s308 + $0x74] sm:$0xff]
      %v348 = vld [vmem:[%s308 + $0x7c] sm:$0xff]
      %v349 = vld [vmem:[%s308 + $0x84] sm:$0xff]
      %v350 = vld [vmem:[%s308 + $0x8c] sm:$0xf]
      %v351 = vld [vmem:[%s308 + $0x90] sm:$0xff]
      %v352 = vld [vmem:[%s308 + $0x98] sm:$0xff]
      %v353 = vld [vmem:[%s308 + $0xa0] sm:$0xff]
      %v354 = vld [vmem:[%s308 + $0xa8] sm:$0xff]
      %v355 = vld [vmem:[%s308 + $0xb0] sm:$0xf]
      %v356 = vld [vmem:[%s308 + $0xb4] sm:$0xff]
      %v357 = vld [vmem:[%s308 + $0xbc] sm:$0xff]
      %v358 = vld [vmem:[%s308 + $0xc4] sm:$0xff]
      %v359 = vld [vmem:[%s308 + $0xcc] sm:$0xff]
      %v360 = vld [vmem:[%s308 + $0xd4] sm:$0xf]
      %v361 = vld [vmem:[%s308 + $0xd8] sm:$0xff]
      %v362 = vld [vmem:[%s308 + $0xe0] sm:$0xff]
      %v363 = vld [vmem:[%s308 + $0xe8] sm:$0xff]
      %v364 = vld [vmem:[%s308 + $0xf0] sm:$0xff]
      %v365 = vld [vmem:[%s308 + $0xf8] sm:$0xf]
      %v366 = vld [vmem:[%s308 + $0xfc] sm:$0xff]
      %v367 = vld [vmem:[%s308 + $0x104] sm:$0xff]
      %v368 = vld [vmem:[%s308 + $0x10c] sm:$0xff]
      %v369 = vld [vmem:[%s308 + $0x114] sm:$0xff]
      %v370 = vld [vmem:[%s308 + $0x11c] sm:$0xf]
      %v371 = vld [vmem:[%s1] sm:$0xf]
      %v372 = vld [vmem:[%s1 + $0x4] sm:$0xf]
      %v373 = vld [vmem:[%s1 + $0x8] sm:$0xf]
      %v374 = vld [vmem:[%s1 + $0xc] sm:$0xf]
      %v375 = vld [vmem:[%s1 + $0x10] sm:$0xf]
      %v376 = vld [vmem:[%s1 + $0x14] sm:$0xf]
      %v377 = vld [vmem:[%s1 + $0x18] sm:$0xf]
      %v378 = vld [vmem:[%s1 + $0x1c] sm:$0xf]
      %v379 = vld [vmem:[%s1 + $0x20] sm:$0xf]
      %v380 = vld [vmem:[%s1 + $0x24] sm:$0xf]
      %v381 = vld [vmem:[%s1 + $0x28] sm:$0xf]
      %v382 = vld [vmem:[%s1 + $0x2c] sm:$0xf]
      %v383 = vld [vmem:[%s1 + $0x30] sm:$0xf]
      %v384 = vld [vmem:[%s1 + $0x34] sm:$0xf]
      %v385 = vld [vmem:[%s1 + $0x38] sm:$0xf]
      %v386 = vld [vmem:[%s1 + $0x3c] sm:$0xf]
      %v387 = vld [vmem:[%s1 + $0x40] sm:$0xf]
      %v388 = vld [vmem:[%s1 + $0x44] sm:$0xf]
      %v389 = vld [vmem:[%s1 + $0x48] sm:$0xf]
      %v390 = vld [vmem:[%s1 + $0x4c] sm:$0xf]
      %v391 = vld [vmem:[%s1 + $0x50] sm:$0xf]
      %v392 = vld [vmem:[%s1 + $0x54] sm:$0xf]
      %v393 = vld [vmem:[%s1 + $0x58] sm:$0xf]
      %v394 = vld [vmem:[%s1 + $0x5c] sm:$0xf]
      %v395 = vld [vmem:[%s1 + $0x60] sm:$0xf]
      %v396 = vld [vmem:[%s1 + $0x64] sm:$0xf]
      %v397 = vld [vmem:[%s1 + $0x68] sm:$0xf]
      %v398 = vld [vmem:[%s1 + $0x6c] sm:$0xf]
      %v399 = vld [vmem:[%s1 + $0x70] sm:$0xf]
      %v400 = vld [vmem:[%s1 + $0x74] sm:$0xf]
      %v401 = vld [vmem:[%s1 + $0x78] sm:$0xf]
      %v402 = vld [vmem:[%s1 + $0x7c] sm:$0xf]
      %v403 = vld [vmem:[%s1 + $0x80] sm:$0xf]
      %v404 = vld [vmem:[%s1 + $0x84] sm:$0xf]
      %v405 = vld [vmem:[%s1 + $0x88] sm:$0xf]
      %v406 = vld [vmem:[%s1 + $0x8c] sm:$0xf]
      %v407 = vld [vmem:[%s1 + $0x90] sm:$0xf]
      %v408 = vld [vmem:[%s1 + $0x94] sm:$0xf]
      %v409 = vld [vmem:[%s1 + $0x98] sm:$0xf]
      %v410 = vld [vmem:[%s1 + $0x9c] sm:$0xf]
      %v411 = vld [vmem:[%s1 + $0xa0] sm:$0xf]
      %v412 = vld [vmem:[%s1 + $0xa4] sm:$0xf]
      %v413 = vld [vmem:[%s1 + $0xa8] sm:$0xf]
      %v414 = vld [vmem:[%s1 + $0xac] sm:$0xf]
      %v415 = vld [vmem:[%s1 + $0xb0] sm:$0xf]
      %v416 = vld [vmem:[%s1 + $0xb4] sm:$0xf]
      %v417 = vld [vmem:[%s1 + $0xb8] sm:$0xf]
      %v418 = vld [vmem:[%s1 + $0xbc] sm:$0xf]
      %v419 = vld [vmem:[%s1 + $0xc0] sm:$0xf]
      %v420 = vld [vmem:[%s1 + $0xc4] sm:$0xf]
      %v421 = vld [vmem:[%s1 + $0xc8] sm:$0xf]
      %v422 = vld [vmem:[%s1 + $0xcc] sm:$0xf]
      %v423 = vld [vmem:[%s1 + $0xd0] sm:$0xf]
      %v424 = vld [vmem:[%s1 + $0xd4] sm:$0xf]
      %v425 = vld [vmem:[%s1 + $0xd8] sm:$0xf]
      %v426 = vld [vmem:[%s1 + $0xdc] sm:$0xf]
      %v427 = vld [vmem:[%s1 + $0xe0] sm:$0xf]
      %v428 = vld [vmem:[%s1 + $0xe4] sm:$0xf]
      %v429 = vld [vmem:[%s1 + $0xe8] sm:$0xf]
      %v430 = vld [vmem:[%s1 + $0xec] sm:$0xf]
      %v431 = vld [vmem:[%s1 + $0xf0] sm:$0xf]
      %v432 = vld [vmem:[%s1 + $0xf4] sm:$0xf]
      %v433 = vld [vmem:[%s1 + $0xf8] sm:$0xf]
      %v434 = vld [vmem:[%s1 + $0xfc] sm:$0xf]
      %v435 = vld [vmem:[%s1 + $0x100] sm:$0xf]
      %v436 = vld [vmem:[%s1 + $0x104] sm:$0xf]
      %v437 = vld [vmem:[%s1 + $0x108] sm:$0xf]
      %v438 = vld [vmem:[%s1 + $0x10c] sm:$0xf]
      %v439 = vld [vmem:[%s1 + $0x110] sm:$0xf]
      %v440 = vld [vmem:[%s1 + $0x114] sm:$0xf]
      %v441 = vld [vmem:[%s1 + $0x118] sm:$0xf]
      %v442 = vld [vmem:[%s1 + $0x11c] sm:$0xf]
      %v443 = vld [vmem:[%s1 + $0x120] sm:$0xf]
      %v444 = vld [vmem:[%s1 + $0x124] sm:$0xf]
      %v445 = vld [vmem:[%s1 + $0x128] sm:$0xf]
      %v446 = vld [vmem:[%s1 + $0x12c] sm:$0xf]
      %v447 = vld [vmem:[%s1 + $0x130] sm:$0xf]
      %v448 = vld [vmem:[%s1 + $0x134] sm:$0xf]
      %v449 = vld [vmem:[%s1 + $0x138] sm:$0xf]
      %v450 = vld [vmem:[%s1 + $0x13c] sm:$0xf]
      %v451 = vld [vmem:[%s1 + $0x140] sm:$0xf]
      %v452 = vld [vmem:[%s1 + $0x144] sm:$0xf]
      %v453 = vld [vmem:[%s1 + $0x148] sm:$0xf]
      %v454 = vld [vmem:[%s1 + $0x14c] sm:$0xf]
      %v455 = vld [vmem:[%s1 + $0x150] sm:$0xf]
      %v456 = vld [vmem:[%s1 + $0x154] sm:$0xf]
      %v457 = vld [vmem:[%s1 + $0x158] sm:$0xf]
      %v458 = vld [vmem:[%s1 + $0x15c] sm:$0xf]
      %v459 = vld [vmem:[%s1 + $0x160] sm:$0xf]
      %v460 = vld [vmem:[%s1 + $0x164] sm:$0xf]
      %v461 = vld [vmem:[%s1 + $0x168] sm:$0xf]
      %v462 = vld [vmem:[%s1 + $0x16c] sm:$0xf]
      %v463 = vld [vmem:[%s1 + $0x170] sm:$0xf]
      %v464 = vld [vmem:[%s1 + $0x174] sm:$0xf]
      %v465 = vld [vmem:[%s1 + $0x178] sm:$0xf]
      %v466 = vld [vmem:[%s1 + $0x17c] sm:$0xf]
      %v467 = vld [vmem:[%s1 + $0x180] sm:$0xf]
      %v468 = vld [vmem:[%s1 + $0x184] sm:$0xf]
      %v469 = vld [vmem:[%s1 + $0x188] sm:$0xf]
      %v470 = vld [vmem:[%s1 + $0x18c] sm:$0xf]
      %v471 = vld [vmem:[%s1 + $0x190] sm:$0xf]
      %v472 = vld [vmem:[%s1 + $0x194] sm:$0xf]
      %v473 = vld [vmem:[%s1 + $0x198] sm:$0xf]
      %v474 = vld [vmem:[%s1 + $0x19c] sm:$0xf]
      %v475 = vld [vmem:[%s1 + $0x1a0] sm:$0xf]
      %v476 = vld [vmem:[%s1 + $0x1a4] sm:$0xf]
      %v477 = vld [vmem:[%s1 + $0x1a8] sm:$0xf]
      %v478 = vld [vmem:[%s1 + $0x1ac] sm:$0xf]
      %v479 = vld [vmem:[%s1 + $0x1b0] sm:$0xf]
      %v480 = vld [vmem:[%s1 + $0x1b4] sm:$0xf]
      %v481 = vld [vmem:[%s1 + $0x1b8] sm:$0xf]
      %v482 = vld [vmem:[%s1 + $0x1bc] sm:$0xf]
      %v483 = vld [vmem:[%s1 + $0x1c0] sm:$0xf]
      %v484 = vld [vmem:[%s1 + $0x1c4] sm:$0xf]
      %v485 = vld [vmem:[%s1 + $0x1c8] sm:$0xf]
      %v486 = vld [vmem:[%s1 + $0x1cc] sm:$0xf]
      %v487 = vld [vmem:[%s1 + $0x1d0] sm:$0xf]
      %v488 = vld [vmem:[%s1 + $0x1d4] sm:$0xf]
      %v489 = vld [vmem:[%s1 + $0x1d8] sm:$0xf]
      %v490 = vld [vmem:[%s1 + $0x1dc] sm:$0xf]
      %v491 = vld [vmem:[%s1 + $0x1e0] sm:$0xf]
      %v492 = vld [vmem:[%s1 + $0x1e4] sm:$0xf]
      %v493 = vld [vmem:[%s1 + $0x1e8] sm:$0xf]
      %v494 = vld [vmem:[%s1 + $0x1ec] sm:$0xf]
      %v495 = vld [vmem:[%s1 + $0x1f0] sm:$0xf]
      %v496 = vld [vmem:[%s1 + $0x1f4] sm:$0xf]
      %v497 = vld [vmem:[%s1 + $0x1f8] sm:$0xf]
      %v498 = vld [vmem:[%s1 + $0x1fc] sm:$0xf]
      %v499 = vld [vmem:[%s1 + $0x200] sm:$0xf]
      %v500 = vld [vmem:[%s1 + $0x204] sm:$0xf]
      %v501 = vld [vmem:[%s1 + $0x208] sm:$0xf]
      %v502 = vld [vmem:[%s1 + $0x20c] sm:$0xf]
      %v503 = vld [vmem:[%s1 + $0x210] sm:$0xf]
      %v504 = vld [vmem:[%s1 + $0x214] sm:$0xf]
      %v505 = vld [vmem:[%s1 + $0x218] sm:$0xf]
      %v506 = vld [vmem:[%s1 + $0x21c] sm:$0xf]
      %v507 = vld [vmem:[%s1 + $0x220] sm:$0xf]
      %v508 = vld [vmem:[%s1 + $0x224] sm:$0xf]
      %v509 = vld [vmem:[%s1 + $0x228] sm:$0xf]
      %v510 = vld [vmem:[%s1 + $0x22c] sm:$0xf]
      %v511 = vld [vmem:[%s1 + $0x230] sm:$0xf]
      %v512 = vld [vmem:[%s1 + $0x234] sm:$0xf]
      %v513 = vld [vmem:[%s1 + $0x238] sm:$0xf]
      %v514 = vld [vmem:[%s1 + $0x23c] sm:$0xf]
      %v515 = vld [vmem:[%s2] sm:$0x1]
      %v517 = vlaneseq
      %v518 = vshrl.u32 %v517, 7
      %v519 = vsub.s32 0, %v518
      %v520 = vrot.slane %v515, %v519
      %v562 = vunpack.c.l.b16 %v331
      %v563 = vunpack.c.h.b16 %v331
      %v564 = vunpack.c.l.b16 %v332
      %v565 = vunpack.c.h.b16 %v332
      %v566 = vunpack.c.l.b16 %v333
      %v567 = vunpack.c.h.b16 %v333
      %v568 = vunpack.c.l.b16 %v334
      %v569 = vunpack.c.h.b16 %v334
      %v570 = vunpack.c.l.b16 %v335
      %v571 = vunpack.c.l.b16 %v336
      %v572 = vunpack.c.h.b16 %v336
      %v573 = vunpack.c.l.b16 %v337
      %v574 = vunpack.c.h.b16 %v337
      %v575 = vunpack.c.l.b16 %v338
      %v576 = vunpack.c.h.b16 %v338
      %v577 = vunpack.c.l.b16 %v339
      %v578 = vunpack.c.h.b16 %v339
      %v579 = vunpack.c.l.b16 %v340
      %v580 = vunpack.c.l.b16 %v341
      %v581 = vunpack.c.h.b16 %v341
      %v582 = vunpack.c.l.b16 %v342
      %v583 = vunpack.c.h.b16 %v342
      %v584 = vunpack.c.l.b16 %v343
      %v585 = vunpack.c.h.b16 %v343
      %v586 = vunpack.c.l.b16 %v344
      %v587 = vunpack.c.h.b16 %v344
      %v588 = vunpack.c.l.b16 %v345
      %v589 = vunpack.c.l.b16 %v346
      %v590 = vunpack.c.h.b16 %v346
      %v591 = vunpack.c.l.b16 %v347
      %v592 = vunpack.c.h.b16 %v347
      %v593 = vunpack.c.l.b16 %v348
      %v594 = vunpack.c.h.b16 %v348
      %v595 = vunpack.c.l.b16 %v349
      %v596 = vunpack.c.h.b16 %v349
      %v597 = vunpack.c.l.b16 %v350
      %v598 = vunpack.c.l.b16 %v351
      %v599 = vunpack.c.h.b16 %v351
      %v600 = vunpack.c.l.b16 %v352
      %v601 = vunpack.c.h.b16 %v352
      %v602 = vunpack.c.l.b16 %v353
      %v603 = vunpack.c.h.b16 %v353
      %v604 = vunpack.c.l.b16 %v354
      %v605 = vunpack.c.h.b16 %v354
      %v606 = vunpack.c.l.b16 %v355
      %v607 = vunpack.c.l.b16 %v356
      %v608 = vunpack.c.h.b16 %v356
      %v609 = vunpack.c.l.b16 %v357
      %v610 = vunpack.c.h.b16 %v357
      %v611 = vunpack.c.l.b16 %v358
      %v612 = vunpack.c.h.b16 %v358
      %v613 = vunpack.c.l.b16 %v359
      %v614 = vunpack.c.h.b16 %v359
      %v615 = vunpack.c.l.b16 %v360
      %v616 = vunpack.c.l.b16 %v361
      %v617 = vunpack.c.h.b16 %v361
      %v618 = vunpack.c.l.b16 %v362
      %v619 = vunpack.c.h.b16 %v362
      %v620 = vunpack.c.l.b16 %v363
      %v621 = vunpack.c.h.b16 %v363
      %v622 = vunpack.c.l.b16 %v364
      %v623 = vunpack.c.h.b16 %v364
      %v624 = vunpack.c.l.b16 %v365
      %v625 = vunpack.c.l.b16 %v366
      %v626 = vunpack.c.h.b16 %v366
      %v627 = vunpack.c.l.b16 %v367
      %v628 = vunpack.c.h.b16 %v367
      %v629 = vunpack.c.l.b16 %v368
      %v630 = vunpack.c.h.b16 %v368
      %v631 = vunpack.c.l.b16 %v369
      %v632 = vunpack.c.h.b16 %v369
      %v633 = vunpack.c.l.b16 %v370
      %v634 = vpack.c.b16 %v571, %v562
      %v635 = vpack.c.b16 %v572, %v563
      %v636 = vpack.c.b16 %v573, %v564
      %v637 = vpack.c.b16 %v574, %v565
      %v638 = vpack.c.b16 %v575, %v566
      %v639 = vpack.c.b16 %v576, %v567
      %v640 = vpack.c.b16 %v577, %v568
      %v641 = vpack.c.b16 %v578, %v569
      %v642 = vpack.c.b16 %v579, %v570
      %v643 = vpack.c.b16 %v589, %v580
      %v644 = vpack.c.b16 %v590, %v581
      %v645 = vpack.c.b16 %v591, %v582
      %v646 = vpack.c.b16 %v592, %v583
      %v647 = vpack.c.b16 %v593, %v584
      %v648 = vpack.c.b16 %v594, %v585
      %v649 = vpack.c.b16 %v595, %v586
      %v650 = vpack.c.b16 %v596, %v587
      %v651 = vpack.c.b16 %v597, %v588
      %v652 = vpack.c.b16 %v607, %v598
      %v653 = vpack.c.b16 %v608, %v599
      %v654 = vpack.c.b16 %v609, %v600
      %v655 = vpack.c.b16 %v610, %v601
      %v656 = vpack.c.b16 %v611, %v602
      %v657 = vpack.c.b16 %v612, %v603
      %v658 = vpack.c.b16 %v613, %v604
      %v659 = vpack.c.b16 %v614, %v605
      %v660 = vpack.c.b16 %v615, %v606
      %v661 = vpack.c.b16 %v625, %v616
      %v662 = vpack.c.b16 %v626, %v617
      %v663 = vpack.c.b16 %v627, %v618
      %v664 = vpack.c.b16 %v628, %v619
      %v665 = vpack.c.b16 %v629, %v620
      %v666 = vpack.c.b16 %v630, %v621
      %v667 = vpack.c.b16 %v631, %v622
      %v668 = vpack.c.b16 %v632, %v623
      %v669 = vpack.c.b16 %v633, %v624
      %v850 = vunpack.c.l.b16 %v371
      %v851 = vunpack.c.l.b16 %v372
      %v852 = vunpack.c.l.b16 %v373
      %v853 = vunpack.c.l.b16 %v374
      %v854 = vunpack.c.l.b16 %v375
      %v855 = vunpack.c.l.b16 %v376
      %v856 = vunpack.c.l.b16 %v377
      %v857 = vunpack.c.l.b16 %v378
      %v858 = vunpack.c.l.b16 %v379
      %v859 = vunpack.c.l.b16 %v380
      %v860 = vunpack.c.l.b16 %v381
      %v861 = vunpack.c.l.b16 %v382
      %v862 = vunpack.c.l.b16 %v383
      %v863 = vunpack.c.l.b16 %v384
      %v864 = vunpack.c.l.b16 %v385
      %v865 = vunpack.c.l.b16 %v386
      %v866 = vunpack.c.l.b16 %v387
      %v867 = vunpack.c.l.b16 %v388
      %v868 = vunpack.c.l.b16 %v389
      %v869 = vunpack.c.l.b16 %v390
      %v870 = vunpack.c.l.b16 %v391
      %v871 = vunpack.c.l.b16 %v392
      %v872 = vunpack.c.l.b16 %v393
      %v873 = vunpack.c.l.b16 %v394
      %v874 = vunpack.c.l.b16 %v395
      %v875 = vunpack.c.l.b16 %v396
      %v876 = vunpack.c.l.b16 %v397
      %v877 = vunpack.c.l.b16 %v398
      %v878 = vunpack.c.l.b16 %v399
      %v879 = vunpack.c.l.b16 %v400
      %v880 = vunpack.c.l.b16 %v401
      %v881 = vunpack.c.l.b16 %v402
      %v882 = vunpack.c.l.b16 %v403
      %v883 = vunpack.c.l.b16 %v404
      %v884 = vunpack.c.l.b16 %v405
      %v885 = vunpack.c.l.b16 %v406
      %v886 = vunpack.c.l.b16 %v407
      %v887 = vunpack.c.l.b16 %v408
      %v888 = vunpack.c.l.b16 %v409
      %v889 = vunpack.c.l.b16 %v410
      %v890 = vunpack.c.l.b16 %v411
      %v891 = vunpack.c.l.b16 %v412
      %v892 = vunpack.c.l.b16 %v413
      %v893 = vunpack.c.l.b16 %v414
      %v894 = vunpack.c.l.b16 %v415
      %v895 = vunpack.c.l.b16 %v416
      %v896 = vunpack.c.l.b16 %v417
      %v897 = vunpack.c.l.b16 %v418
      %v898 = vunpack.c.l.b16 %v419
      %v899 = vunpack.c.l.b16 %v420
      %v900 = vunpack.c.l.b16 %v421
      %v901 = vunpack.c.l.b16 %v422
      %v902 = vunpack.c.l.b16 %v423
      %v903 = vunpack.c.l.b16 %v424
      %v904 = vunpack.c.l.b16 %v425
      %v905 = vunpack.c.l.b16 %v426
      %v906 = vunpack.c.l.b16 %v427
      %v907 = vunpack.c.l.b16 %v428
      %v908 = vunpack.c.l.b16 %v429
      %v909 = vunpack.c.l.b16 %v430
      %v910 = vunpack.c.l.b16 %v431
      %v911 = vunpack.c.l.b16 %v432
      %v912 = vunpack.c.l.b16 %v433
      %v913 = vunpack.c.l.b16 %v434
      %v914 = vunpack.c.l.b16 %v435
      %v915 = vunpack.c.l.b16 %v436
      %v916 = vunpack.c.l.b16 %v437
      %v917 = vunpack.c.l.b16 %v438
      %v918 = vunpack.c.l.b16 %v439
      %v919 = vunpack.c.l.b16 %v440
      %v920 = vunpack.c.l.b16 %v441
      %v921 = vunpack.c.l.b16 %v442
      %v922 = vunpack.c.l.b16 %v443
      %v923 = vunpack.c.l.b16 %v444
      %v924 = vunpack.c.l.b16 %v445
      %v925 = vunpack.c.l.b16 %v446
      %v926 = vunpack.c.l.b16 %v447
      %v927 = vunpack.c.l.b16 %v448
      %v928 = vunpack.c.l.b16 %v449
      %v929 = vunpack.c.l.b16 %v450
      %v930 = vunpack.c.l.b16 %v451
      %v931 = vunpack.c.l.b16 %v452
      %v932 = vunpack.c.l.b16 %v453
      %v933 = vunpack.c.l.b16 %v454
      %v934 = vunpack.c.l.b16 %v455
      %v935 = vunpack.c.l.b16 %v456
      %v936 = vunpack.c.l.b16 %v457
      %v937 = vunpack.c.l.b16 %v458
      %v938 = vunpack.c.l.b16 %v459
      %v939 = vunpack.c.l.b16 %v460
      %v940 = vunpack.c.l.b16 %v461
      %v941 = vunpack.c.l.b16 %v462
      %v942 = vunpack.c.l.b16 %v463
      %v943 = vunpack.c.l.b16 %v464
      %v944 = vunpack.c.l.b16 %v465
      %v945 = vunpack.c.l.b16 %v466
      %v946 = vunpack.c.l.b16 %v467
      %v947 = vunpack.c.l.b16 %v468
      %v948 = vunpack.c.l.b16 %v469
      %v949 = vunpack.c.l.b16 %v470
      %v950 = vunpack.c.l.b16 %v471
      %v951 = vunpack.c.l.b16 %v472
      %v952 = vunpack.c.l.b16 %v473
      %v953 = vunpack.c.l.b16 %v474
      %v954 = vunpack.c.l.b16 %v475
      %v955 = vunpack.c.l.b16 %v476
      %v956 = vunpack.c.l.b16 %v477
      %v957 = vunpack.c.l.b16 %v478
      %v958 = vunpack.c.l.b16 %v479
      %v959 = vunpack.c.l.b16 %v480
      %v960 = vunpack.c.l.b16 %v481
      %v961 = vunpack.c.l.b16 %v482
      %v962 = vunpack.c.l.b16 %v483
      %v963 = vunpack.c.l.b16 %v484
      %v964 = vunpack.c.l.b16 %v485
      %v965 = vunpack.c.l.b16 %v486
      %v966 = vunpack.c.l.b16 %v487
      %v967 = vunpack.c.l.b16 %v488
      %v968 = vunpack.c.l.b16 %v489
      %v969 = vunpack.c.l.b16 %v490
      %v970 = vunpack.c.l.b16 %v491
      %v971 = vunpack.c.l.b16 %v492
      %v972 = vunpack.c.l.b16 %v493
      %v973 = vunpack.c.l.b16 %v494
      %v974 = vunpack.c.l.b16 %v495
      %v975 = vunpack.c.l.b16 %v496
      %v976 = vunpack.c.l.b16 %v497
      %v977 = vunpack.c.l.b16 %v498
      %v978 = vunpack.c.l.b16 %v499
      %v979 = vunpack.c.l.b16 %v500
      %v980 = vunpack.c.l.b16 %v501
      %v981 = vunpack.c.l.b16 %v502
      %v982 = vunpack.c.l.b16 %v503
      %v983 = vunpack.c.l.b16 %v504
      %v984 = vunpack.c.l.b16 %v505
      %v985 = vunpack.c.l.b16 %v506
      %v986 = vunpack.c.l.b16 %v507
      %v987 = vunpack.c.l.b16 %v508
      %v988 = vunpack.c.l.b16 %v509
      %v989 = vunpack.c.l.b16 %v510
      %v990 = vunpack.c.l.b16 %v511
      %v991 = vunpack.c.l.b16 %v512
      %v992 = vunpack.c.l.b16 %v513
      %v993 = vunpack.c.l.b16 %v514
      %v994 = vpack.c.b16 %v851, %v850
      %v995 = vpack.c.b16 %v853, %v852
      %v996 = vpack.c.b16 %v855, %v854
      %v997 = vpack.c.b16 %v857, %v856
      %v998 = vpack.c.b16 %v859, %v858
      %v999 = vpack.c.b16 %v861, %v860
      %v1000 = vpack.c.b16 %v863, %v862
      %v1001 = vpack.c.b16 %v865, %v864
      %v1002 = vpack.c.b16 %v867, %v866
      %v1003 = vpack.c.b16 %v869, %v868
      %v1004 = vpack.c.b16 %v871, %v870
      %v1005 = vpack.c.b16 %v873, %v872
      %v1006 = vpack.c.b16 %v875, %v874
      %v1007 = vpack.c.b16 %v877, %v876
      %v1008 = vpack.c.b16 %v879, %v878
      %v1009 = vpack.c.b16 %v881, %v880
      %v1010 = vpack.c.b16 %v883, %v882
      %v1011 = vpack.c.b16 %v885, %v884
      %v1012 = vpack.c.b16 %v887, %v886
      %v1013 = vpack.c.b16 %v889, %v888
      %v1014 = vpack.c.b16 %v891, %v890
      %v1015 = vpack.c.b16 %v893, %v892
      %v1016 = vpack.c.b16 %v895, %v894
      %v1017 = vpack.c.b16 %v897, %v896
      %v1018 = vpack.c.b16 %v899, %v898
      %v1019 = vpack.c.b16 %v901, %v900
      %v1020 = vpack.c.b16 %v903, %v902
      %v1021 = vpack.c.b16 %v905, %v904
      %v1022 = vpack.c.b16 %v907, %v906
      %v1023 = vpack.c.b16 %v909, %v908
      %v1024 = vpack.c.b16 %v911, %v910
      %v1025 = vpack.c.b16 %v913, %v912
      %v1026 = vpack.c.b16 %v915, %v914
      %v1027 = vpack.c.b16 %v917, %v916
      %v1028 = vpack.c.b16 %v919, %v918
      %v1029 = vpack.c.b16 %v921, %v920
      %v1030 = vpack.c.b16 %v923, %v922
      %v1031 = vpack.c.b16 %v925, %v924
      %v1032 = vpack.c.b16 %v927, %v926
      %v1033 = vpack.c.b16 %v929, %v928
      %v1034 = vpack.c.b16 %v931, %v930
      %v1035 = vpack.c.b16 %v933, %v932
      %v1036 = vpack.c.b16 %v935, %v934
      %v1037 = vpack.c.b16 %v937, %v936
      %v1038 = vpack.c.b16 %v939, %v938
      %v1039 = vpack.c.b16 %v941, %v940
      %v1040 = vpack.c.b16 %v943, %v942
      %v1041 = vpack.c.b16 %v945, %v944
      %v1042 = vpack.c.b16 %v947, %v946
      %v1043 = vpack.c.b16 %v949, %v948
      %v1044 = vpack.c.b16 %v951, %v950
      %v1045 = vpack.c.b16 %v953, %v952
      %v1046 = vpack.c.b16 %v955, %v954
      %v1047 = vpack.c.b16 %v957, %v956
      %v1048 = vpack.c.b16 %v959, %v958
      %v1049 = vpack.c.b16 %v961, %v960
      %v1050 = vpack.c.b16 %v963, %v962
      %v1051 = vpack.c.b16 %v965, %v964
      %v1052 = vpack.c.b16 %v967, %v966
      %v1053 = vpack.c.b16 %v969, %v968
      %v1054 = vpack.c.b16 %v971, %v970
      %v1055 = vpack.c.b16 %v973, %v972
      %v1056 = vpack.c.b16 %v975, %v974
      %v1057 = vpack.c.b16 %v977, %v976
      %v1058 = vpack.c.b16 %v979, %v978
      %v1059 = vpack.c.b16 %v981, %v980
      %v1060 = vpack.c.b16 %v983, %v982
      %v1061 = vpack.c.b16 %v985, %v984
      %v1062 = vpack.c.b16 %v987, %v986
      %v1063 = vpack.c.b16 %v989, %v988
      %v1064 = vpack.c.b16 %v991, %v990
      %v1065 = vpack.c.b16 %v993, %v992
      %1138 = vmatprep.subr.bf16.mxu0 0
      %1139 = vmatpush1.bf16.msra.mxu0 %v994
      %1140 = vmatprep.subr.bf16.mxu0 0
      %1141 = vmatpush1.bf16.msra.mxu0 %v995
      %1142 = vmatprep.subr.bf16.mxu0 0
      %1143 = vmatpush1.bf16.msra.mxu0 %v996
      %1144 = vmatprep.subr.bf16.mxu0 0
      %1145 = vmatpush1.bf16.msra.mxu0 %v997
      %1146 = vmatprep.subr.bf16.mxu0 0
      %1147 = vmatpush1.bf16.msra.mxu0 %v998
      %1148 = vmatprep.subr.bf16.mxu0 0
      %1149 = vmatpush1.bf16.msra.mxu0 %v999
      %1150 = vmatprep.subr.bf16.mxu0 0
      %1151 = vmatpush1.bf16.msra.mxu0 %v1000
      %1152 = vmatprep.subr.bf16.mxu0 0
      %1153 = vmatpush1.bf16.msra.mxu0 %v1001
      %1154 = vmatprep.subr.bf16.mxu0 0
      %1155 = vmatpush1.bf16.msra.mxu0 %v1002
      %1156 = vmatprep.subr.bf16.mxu0 0
      %1157 = vmatpush1.bf16.msra.mxu0 %v1003
      %1158 = vmatprep.subr.bf16.mxu0 0
      %1159 = vmatpush1.bf16.msra.mxu0 %v1004
      %1160 = vmatprep.subr.bf16.mxu0 0
      %1161 = vmatpush1.bf16.msra.mxu0 %v1005
      %1162 = vmatprep.subr.bf16.mxu0 0
      %1163 = vmatpush1.bf16.msra.mxu0 %v1006
      %1164 = vmatprep.subr.bf16.mxu0 0
      %1165 = vmatpush1.bf16.msra.mxu0 %v1007
      %1166 = vmatprep.subr.bf16.mxu0 0
      %1167 = vmatpush1.bf16.msra.mxu0 %v1008
      %1168 = vmatprep.subr.bf16.mxu0 0
      %1169 = vmatpush1.bf16.msra.mxu0 %v1009
      %1170 = vmatprep.mubr.bf16.mxu0 %v635
      %1171 = vmatmul.mubr.bf16.gmra.mrb[0].mxu0 %v634
      %v1172 = vpop.f32.mrb[0].mxu0
      %v1173 = vadd.f32 %v520, %v1172
      %v1174 = vpop.f32.mrb[0].mxu0
      %v1175 = vpop.f32.mrb[0].mxu0
      %v1176 = vadd.f32 %v520, %v1175
      %v1177 = vpop.f32.mrb[0].mxu0
      %1178 = vmatprep.mubr.bf16.mxu0 %v644
      %1179 = vmatmul.mubr.bf16.gmra.mrb[0].mxu0 %v643
      %v1180 = vpop.f32.mrb[0].mxu0
      %v1181 = vadd.f32 %v520, %v1180
      %v1182 = vpop.f32.mrb[0].mxu0
      %v1183 = vpop.f32.mrb[0].mxu0
      %v1184 = vadd.f32 %v520, %v1183
      %v1185 = vpop.f32.mrb[0].mxu0
      %1186 = vmatprep.mubr.bf16.mxu0 %v653
      %1187 = vmatmul.mubr.bf16.gmra.mrb[0].mxu0 %v652
      %v1188 = vpop.f32.mrb[0].mxu0
      %v1189 = vadd.f32 %v520, %v1188
      %v1190 = vpop.f32.mrb[0].mxu0
      %v1191 = vpop.f32.mrb[0].mxu0
      %v1192 = vadd.f32 %v520, %v1191
      %v1193 = vpop.f32.mrb[0].mxu0
      %1194 = vmatprep.mubr.bf16.mxu0 %v662
      %1195 = vmatmul.mubr.bf16.gmra.mrb[0].mxu0 %v661
      %v1196 = vpop.f32.mrb[0].mxu0
      %v1197 = vadd.f32 %v520, %v1196
      %v1198 = vpop.f32.mrb[0].mxu0
      %v1199 = vpop.f32.mrb[0].mxu0
      %v1200 = vadd.f32 %v520, %v1199
      %v1201 = vpop.f32.mrb[0].mxu0
      %1202 = vdwg.mxu0
      %1203 = vmatprep.subr.bf16.mxu0 0
      %1204 = vmatpush1.bf16.msra.mxu0 %v1010
      %1205 = vmatprep.subr.bf16.mxu0 0
      %1206 = vmatpush1.bf16.msra.mxu0 %v1011
      %1207 = vmatprep.subr.bf16.mxu0 0
      %1208 = vmatpush1.bf16.msra.mxu0 %v1012
      %1209 = vmatprep.subr.bf16.mxu0 0
      %1210 = vmatpush1.bf16.msra.mxu0 %v1013
      %1211 = vmatprep.subr.bf16.mxu0 0
      %1212 = vmatpush1.bf16.msra.mxu0 %v1014
      %1213 = vmatprep.subr.bf16.mxu0 0
      %1214 = vmatpush1.bf16.msra.mxu0 %v1015
      %1215 = vmatprep.subr.bf16.mxu0 0
      %1216 = vmatpush1.bf16.msra.mxu0 %v1016
      %1217 = vmatprep.subr.bf16.mxu0 0
      %1218 = vmatpush1.bf16.msra.mxu0 %v1017
      %1219 = vmatprep.subr.bf16.mxu0 0
      %1220 = vmatpush1.bf16.msra.mxu0 %v1018
      %1221 = vmatprep.subr.bf16.mxu0 0
      %1222 = vmatpush1.bf16.msra.mxu0 %v1019
      %1223 = vmatprep.subr.bf16.mxu0 0
      %1224 = vmatpush1.bf16.msra.mxu0 %v1020
      %1225 = vmatprep.subr.bf16.mxu0 0
      %1226 = vmatpush1.bf16.msra.mxu0 %v1021
      %1227 = vmatprep.subr.bf16.mxu0 0
      %1228 = vmatpush1.bf16.msra.mxu0 %v1022
      %1229 = vmatprep.subr.bf16.mxu0 0
      %1230 = vmatpush1.bf16.msra.mxu0 %v1023
      %1231 = vmatprep.subr.bf16.mxu0 0
      %1232 = vmatpush1.bf16.msra.mxu0 %v1024
      %1233 = vmatprep.subr.bf16.mxu0 0
      %1234 = vmatpush1.bf16.msra.mxu0 %v1025
      %1235 = vmatprep.mubr.bf16.mxu0 %v637
      %1236 = vmatmul.mubr.bf16.gmra.mrb[0].mxu0 %v636
      %v1237 = vpop.f32.mrb[0].mxu0
      %v1238 = vadd.f32 %v1173, %v1237
      %v1239 = vpop.f32.mrb[0].mxu0
      %v1240 = vpop.f32.mrb[0].mxu0
      %v1241 = vadd.f32 %v1176, %v1240
      %v1242 = vpop.f32.mrb[0].mxu0
      %1243 = vmatprep.mubr.bf16.mxu0 %v646
      %1244 = vmatmul.mubr.bf16.gmra.mrb[0].mxu0 %v645
      %v1245 = vpop.f32.mrb[0].mxu0
      %v1246 = vadd.f32 %v1181, %v1245
      %v1247 = vpop.f32.mrb[0].mxu0
      %v1248 = vpop.f32.mrb[0].mxu0
      %v1249 = vadd.f32 %v1184, %v1248
      %v1250 = vpop.f32.mrb[0].mxu0
      %1251 = vmatprep.mubr.bf16.mxu0 %v655
      %1252 = vmatmul.mubr.bf16.gmra.mrb[0].mxu0 %v654
      %v1253 = vpop.f32.mrb[0].mxu0
      %v1254 = vadd.f32 %v1189, %v1253
      %v1255 = vpop.f32.mrb[0].mxu0
      %v1256 = vpop.f32.mrb[0].mxu0
      %v1257 = vadd.f32 %v1192, %v1256
      %v1258 = vpop.f32.mrb[0].mxu0
      %1259 = vmatprep.mubr.bf16.mxu0 %v664
      %1260 = vmatmul.mubr.bf16.gmra.mrb[0].mxu0 %v663
      %v1261 = vpop.f32.mrb[0].mxu0
      %v1262 = vadd.f32 %v1197, %v1261
      %v1263 = vpop.f32.mrb[0].mxu0
      %v1264 = vpop.f32.mrb[0].mxu0
      %v1265 = vadd.f32 %v1200, %v1264
      %v1266 = vpop.f32.mrb[0].mxu0
      %1267 = vdwg.mxu0
      %1268 = vmatprep.subr.bf16.mxu0 0
      %1269 = vmatpush1.bf16.msra.mxu0 %v1026
      %1270 = vmatprep.subr.bf16.mxu0 0
      %1271 = vmatpush1.bf16.msra.mxu0 %v1027
      %1272 = vmatprep.subr.bf16.mxu0 0
      %1273 = vmatpush1.bf16.msra.mxu0 %v1028
      %1274 = vmatprep.subr.bf16.mxu0 0
      %1275 = vmatpush1.bf16.msra.mxu0 %v1029
      %1276 = vmatprep.subr.bf16.mxu0 0
      %1277 = vmatpush1.bf16.msra.mxu0 %v1030
      %1278 = vmatprep.subr.bf16.mxu0 0
      %1279 = vmatpush1.bf16.msra.mxu0 %v1031
      %1280 = vmatprep.subr.bf16.mxu0 0
      %1281 = vmatpush1.bf16.msra.mxu0 %v1032
      %1282 = vmatprep.subr.bf16.mxu0 0
      %1283 = vmatpush1.bf16.msra.mxu0 %v1033
      %1284 = vmatprep.subr.bf16.mxu0 0
      %1285 = vmatpush1.bf16.msra.mxu0 %v1034
      %1286 = vmatprep.subr.bf16.mxu0 0
      %1287 = vmatpush1.bf16.msra.mxu0 %v1035
      %1288 = vmatprep.subr.bf16.mxu0 0
      %1289 = vmatpush1.bf16.msra.mxu0 %v1036
      %1290 = vmatprep.subr.bf16.mxu0 0
      %1291 = vmatpush1.bf16.msra.mxu0 %v1037
      %1292 = vmatprep.subr.bf16.mxu0 0
      %1293 = vmatpush1.bf16.msra.mxu0 %v1038
      %1294 = vmatprep.subr.bf16.mxu0 0
      %1295 = vmatpush1.bf16.msra.mxu0 %v1039
      %1296 = vmatprep.subr.bf16.mxu0 0
      %1297 = vmatpush1.bf16.msra.mxu0 %v1040
      %1298 = vmatprep.subr.bf16.mxu0 0
      %1299 = vmatpush1.bf16.msra.mxu0 %v1041
      %1300 = vmatprep.mubr.bf16.mxu0 %v639
      %1301 = vmatmul.mubr.bf16.gmra.mrb[0].mxu0 %v638
      %v1302 = vpop.f32.mrb[0].mxu0
      %v1303 = vadd.f32 %v1238, %v1302
      %v1304 = vpop.f32.mrb[0].mxu0
      %v1305 = vpop.f32.mrb[0].mxu0
      %v1306 = vadd.f32 %v1241, %v1305
      %v1307 = vpop.f32.mrb[0].mxu0
      %1308 = vmatprep.mubr.bf16.mxu0 %v648
      %1309 = vmatmul.mubr.bf16.gmra.mrb[0].mxu0 %v647
      %v1310 = vpop.f32.mrb[0].mxu0
      %v1311 = vadd.f32 %v1246, %v1310
      %v1312 = vpop.f32.mrb[0].mxu0
      %v1313 = vpop.f32.mrb[0].mxu0
      %v1314 = vadd.f32 %v1249, %v1313
      %v1315 = vpop.f32.mrb[0].mxu0
      %1316 = vmatprep.mubr.bf16.mxu0 %v657
      %1317 = vmatmul.mubr.bf16.gmra.mrb[0].mxu0 %v656
      %v1318 = vpop.f32.mrb[0].mxu0
      %v1319 = vadd.f32 %v1254, %v1318
      %v1320 = vpop.f32.mrb[0].mxu0
      %v1321 = vpop.f32.mrb[0].mxu0
      %v1322 = vadd.f32 %v1257, %v1321
      %v1323 = vpop.f32.mrb[0].mxu0
      %1324 = vmatprep.mubr.bf16.mxu0 %v666
      %1325 = vmatmul.mubr.bf16.gmra.mrb[0].mxu0 %v665
      %v1326 = vpop.f32.mrb[0].mxu0
      %v1327 = vadd.f32 %v1262, %v1326
      %v1328 = vpop.f32.mrb[0].mxu0
      %v1329 = vpop.f32.mrb[0].mxu0
      %v1330 = vadd.f32 %v1265, %v1329
      %v1331 = vpop.f32.mrb[0].mxu0
      %1332 = vdwg.mxu0
      %1333 = vmatprep.subr.bf16.mxu0 0
      %1334 = vmatpush1.bf16.msra.mxu0 %v1042
      %1335 = vmatprep.subr.bf16.mxu0 0
      %1336 = vmatpush1.bf16.msra.mxu0 %v1043
      %1337 = vmatprep.subr.bf16.mxu0 0
      %1338 = vmatpush1.bf16.msra.mxu0 %v1044
      %1339 = vmatprep.subr.bf16.mxu0 0
      %1340 = vmatpush1.bf16.msra.mxu0 %v1045
      %1341 = vmatprep.subr.bf16.mxu0 0
      %1342 = vmatpush1.bf16.msra.mxu0 %v1046
      %1343 = vmatprep.subr.bf16.mxu0 0
      %1344 = vmatpush1.bf16.msra.mxu0 %v1047
      %1345 = vmatprep.subr.bf16.mxu0 0
      %1346 = vmatpush1.bf16.msra.mxu0 %v1048
      %1347 = vmatprep.subr.bf16.mxu0 0
      %1348 = vmatpush1.bf16.msra.mxu0 %v1049
      %1349 = vmatprep.subr.bf16.mxu0 0
      %1350 = vmatpush1.bf16.msra.mxu0 %v1050
      %1351 = vmatprep.subr.bf16.mxu0 0
      %1352 = vmatpush1.bf16.msra.mxu0 %v1051
      %1353 = vmatprep.subr.bf16.mxu0 0
      %1354 = vmatpush1.bf16.msra.mxu0 %v1052
      %1355 = vmatprep.subr.bf16.mxu0 0
      %1356 = vmatpush1.bf16.msra.mxu0 %v1053
      %1357 = vmatprep.subr.bf16.mxu0 0
      %1358 = vmatpush1.bf16.msra.mxu0 %v1054
      %1359 = vmatprep.subr.bf16.mxu0 0
      %1360 = vmatpush1.bf16.msra.mxu0 %v1055
      %1361 = vmatprep.subr.bf16.mxu0 0
      %1362 = vmatpush1.bf16.msra.mxu0 %v1056
      %1363 = vmatprep.subr.bf16.mxu0 0
      %1364 = vmatpush1.bf16.msra.mxu0 %v1057
      %1365 = vmatprep.mubr.bf16.mxu0 %v641
      %1366 = vmatmul.mubr.bf16.gmra.mrb[0].mxu0 %v640
      %v1367 = vpop.f32.mrb[0].mxu0
      %v1368 = vadd.f32 %v1303, %v1367
      %v1369 = vpop.f32.mrb[0].mxu0
      %v1370 = vpop.f32.mrb[0].mxu0
      %v1371 = vadd.f32 %v1306, %v1370
      %v1372 = vpop.f32.mrb[0].mxu0
      %1373 = vmatprep.mubr.bf16.mxu0 %v650
      %1374 = vmatmul.mubr.bf16.gmra.mrb[0].mxu0 %v649
      %v1375 = vpop.f32.mrb[0].mxu0
      %v1376 = vadd.f32 %v1311, %v1375
      %v1377 = vpop.f32.mrb[0].mxu0
      %v1378 = vpop.f32.mrb[0].mxu0
      %v1379 = vadd.f32 %v1314, %v1378
      %v1380 = vpop.f32.mrb[0].mxu0
      %1381 = vmatprep.mubr.bf16.mxu0 %v659
      %1382 = vmatmul.mubr.bf16.gmra.mrb[0].mxu0 %v658
      %v1383 = vpop.f32.mrb[0].mxu0
      %v1384 = vadd.f32 %v1319, %v1383
      %v1385 = vpop.f32.mrb[0].mxu0
      %v1386 = vpop.f32.mrb[0].mxu0
      %v1387 = vadd.f32 %v1322, %v1386
      %v1388 = vpop.f32.mrb[0].mxu0
      %1389 = vmatprep.mubr.bf16.mxu0 %v668
      %1390 = vmatmul.mubr.bf16.gmra.mrb[0].mxu0 %v667
      %v1391 = vpop.f32.mrb[0].mxu0
      %v1392 = vadd.f32 %v1327, %v1391
      %v1393 = vpop.f32.mrb[0].mxu0
      %v1394 = vpop.f32.mrb[0].mxu0
      %v1395 = vadd.f32 %v1330, %v1394
      %v1396 = vpop.f32.mrb[0].mxu0
      %1397 = vdwg.mxu0
      %1398 = vmatprep.subr.bf16.mxu0 0
      %1399 = vmatpush1.bf16.msra.mxu0 %v1058
      %1400 = vmatprep.subr.bf16.mxu0 0
      %1401 = vmatpush1.bf16.msra.mxu0 %v1059
      %1402 = vmatprep.subr.bf16.mxu0 0
      %1403 = vmatpush1.bf16.msra.mxu0 %v1060
      %1404 = vmatprep.subr.bf16.mxu0 0
      %1405 = vmatpush1.bf16.msra.mxu0 %v1061
      %1406 = vmatprep.subr.bf16.mxu0 0
      %1407 = vmatpush1.bf16.msra.mxu0 %v1062
      %1408 = vmatprep.subr.bf16.mxu0 0
      %1409 = vmatpush1.bf16.msra.mxu0 %v1063
      %1410 = vmatprep.subr.bf16.mxu0 0
      %1411 = vmatpush1.bf16.msra.mxu0 %v1064
      %1412 = vmatprep.subr.bf16.mxu0 0
      %1413 = vmatpush1.bf16.msra.mxu0 %v1065
      %1414 = vmatprep.subr.bf16.mxu0 0
      %1415 = vmatpush1.bf16.msra.mxu0 0
      %1416 = vmatprep.subr.bf16.mxu0 0
      %1417 = vmatpush1.bf16.msra.mxu0 0
      %1418 = vmatprep.subr.bf16.mxu0 0
      %1419 = vmatpush1.bf16.msra.mxu0 0
      %1420 = vmatprep.subr.bf16.mxu0 0
      %1421 = vmatpush1.bf16.msra.mxu0 0
      %1422 = vmatprep.subr.bf16.mxu0 0
      %1423 = vmatpush1.bf16.msra.mxu0 0
      %1424 = vmatprep.subr.bf16.mxu0 0
      %1425 = vmatpush1.bf16.msra.mxu0 0
      %1426 = vmatprep.subr.bf16.mxu0 0
      %1427 = vmatpush1.bf16.msra.mxu0 0
      %1428 = vmatprep.subr.bf16.mxu0 0
      %1429 = vmatpush1.bf16.msra.mxu0 0
      %1430 = vmatprep.mubr.bf16.mxu0 0
      %1431 = vmatmul.mubr.bf16.gmra.mrb[0].mxu0 %v642
      %v1432 = vpop.f32.mrb[0].mxu0
      %v1433 = vadd.f32 %v1368, %v1432
      %v1434 = vpop.f32.mrb[0].mxu0
      %v1435 = vpop.f32.mrb[0].mxu0
      %v1436 = vadd.f32 %v1371, %v1435
      %v1437 = vpop.f32.mrb[0].mxu0
      %1438 = vmatprep.mubr.bf16.mxu0 0
      %1439 = vmatmul.mubr.bf16.gmra.mrb[0].mxu0 %v651
      %v1440 = vpop.f32.mrb[0].mxu0
      %v1441 = vadd.f32 %v1376, %v1440
      %v1442 = vpop.f32.mrb[0].mxu0
      %v1443 = vpop.f32.mrb[0].mxu0
      %v1444 = vadd.f32 %v1379, %v1443
      %v1445 = vpop.f32.mrb[0].mxu0
      %1446 = vmatprep.mubr.bf16.mxu0 0
      %1447 = vmatmul.mubr.bf16.gmra.mrb[0].mxu0 %v660
      %v1448 = vpop.f32.mrb[0].mxu0
      %v1449 = vadd.f32 %v1384, %v1448
      %v1450 = vpop.f32.mrb[0].mxu0
      %v1451 = vpop.f32.mrb[0].mxu0
      %v1452 = vadd.f32 %v1387, %v1451
      %v1453 = vpop.f32.mrb[0].mxu0
      %1454 = vmatprep.mubr.bf16.mxu0 0
      %1455 = vmatmul.mubr.bf16.gmra.mrb[0].mxu0 %v669
      %v1456 = vpop.f32.mrb[0].mxu0
      %v1457 = vadd.f32 %v1392, %v1456
      %v1458 = vpop.f32.mrb[0].mxu0
      %v1459 = vpop.f32.mrb[0].mxu0
      %v1460 = vadd.f32 %v1395, %v1459
      %v1461 = vpop.f32.mrb[0].mxu0
      %1462 = vdwg.mxu0
      %v1463 = vld [vmem:[%s318] sm:$0xf]
      %v1464 = vld [vmem:[%s318 + $0x4] sm:$0xf]
      %v1465 = vld [vmem:[%s318 + $0x8] sm:$0xf]
      %v1466 = vld [vmem:[%s318 + $0xc] sm:$0xf]
      %v1467 = vld [vmem:[%s318 + $0x10] sm:$0xf]
      %v1468 = vld [vmem:[%s318 + $0x14] sm:$0xf]
      %v1469 = vld [vmem:[%s318 + $0x18] sm:$0xf]
      %v1470 = vld [vmem:[%s318 + $0x1c] sm:$0xf]
      %v1471 = vld [vmem:[%s4] sm:$0xf]
      %v1472 = vld [vmem:[%s4 + $0x4] sm:$0xf]
      %v1473 = vld [vmem:[%s4 + $0x8] sm:$0xf]
      %v1474 = vld [vmem:[%s4 + $0xc] sm:$0xf]
      %v1475 = vld [vmem:[%s4 + $0x10] sm:$0xf]
      %v1476 = vld [vmem:[%s4 + $0x14] sm:$0xf]
      %v1477 = vld [vmem:[%s4 + $0x18] sm:$0xf]
      %v1478 = vld [vmem:[%s4 + $0x1c] sm:$0xf]
      %v1479 = vld [vmem:[%s4 + $0x20] sm:$0xf]
      %v1480 = vld [vmem:[%s4 + $0x24] sm:$0xf]
      %v1481 = vld [vmem:[%s4 + $0x28] sm:$0xf]
      %v1482 = vld [vmem:[%s4 + $0x2c] sm:$0xf]
      %v1483 = vld [vmem:[%s4 + $0x30] sm:$0xf]
      %v1484 = vld [vmem:[%s4 + $0x34] sm:$0xf]
      %v1485 = vld [vmem:[%s4 + $0x38] sm:$0xf]
      %v1486 = vld [vmem:[%s4 + $0x3c] sm:$0xf]
      %v1495 = vunpack.c.l.b16 %v1463
      %v1496 = vunpack.c.l.b16 %v1464
      %v1497 = vunpack.c.l.b16 %v1465
      %v1498 = vunpack.c.l.b16 %v1466
      %v1499 = vunpack.c.l.b16 %v1467
      %v1500 = vunpack.c.l.b16 %v1468
      %v1501 = vunpack.c.l.b16 %v1469
      %v1502 = vunpack.c.l.b16 %v1470
      %v1503 = vpack.c.b16 %v1496, %v1495
      %v1504 = vpack.c.b16 %v1498, %v1497
      %v1505 = vpack.c.b16 %v1500, %v1499
      %v1506 = vpack.c.b16 %v1502, %v1501
      %v1527 = vunpack.c.l.b16 %v1471
      %v1528 = vunpack.c.l.b16 %v1472
      %v1529 = vunpack.c.l.b16 %v1473
      %v1530 = vunpack.c.l.b16 %v1474
      %v1531 = vunpack.c.l.b16 %v1475
      %v1532 = vunpack.c.l.b16 %v1476
      %v1533 = vunpack.c.l.b16 %v1477
      %v1534 = vunpack.c.l.b16 %v1478
      %v1535 = vunpack.c.l.b16 %v1479
      %v1536 = vunpack.c.l.b16 %v1480
      %v1537 = vunpack.c.l.b16 %v1481
      %v1538 = vunpack.c.l.b16 %v1482
      %v1539 = vunpack.c.l.b16 %v1483
      %v1540 = vunpack.c.l.b16 %v1484
      %v1541 = vunpack.c.l.b16 %v1485
      %v1542 = vunpack.c.l.b16 %v1486
      %v1543 = vpack.c.b16 %v1528, %v1527
      %v1544 = vpack.c.b16 %v1530, %v1529
      %v1545 = vpack.c.b16 %v1532, %v1531
      %v1546 = vpack.c.b16 %v1534, %v1533
      %v1547 = vpack.c.b16 %v1536, %v1535
      %v1548 = vpack.c.b16 %v1538, %v1537
      %v1549 = vpack.c.b16 %v1540, %v1539
      %v1550 = vpack.c.b16 %v1542, %v1541
      %1559 = vmatprep.subr.bf16.mxu0 0
      %1560 = vmatpush1.bf16.msra.mxu0 %v1543
      %1561 = vmatprep.subr.bf16.mxu0 0
      %1562 = vmatpush1.bf16.msra.mxu0 %v1544
      %1563 = vmatprep.subr.bf16.mxu0 0
      %1564 = vmatpush1.bf16.msra.mxu0 %v1545
      %1565 = vmatprep.subr.bf16.mxu0 0
      %1566 = vmatpush1.bf16.msra.mxu0 %v1546
      %1567 = vmatprep.subr.bf16.mxu0 0
      %1568 = vmatpush1.bf16.msra.mxu0 %v1547
      %1569 = vmatprep.subr.bf16.mxu0 0
      %1570 = vmatpush1.bf16.msra.mxu0 %v1548
      %1571 = vmatprep.subr.bf16.mxu0 0
      %1572 = vmatpush1.bf16.msra.mxu0 %v1549
      %1573 = vmatprep.subr.bf16.mxu0 0
      %1574 = vmatpush1.bf16.msra.mxu0 %v1550
      %1575 = vmatprep.subr.bf16.mxu0 0
      %1576 = vmatpush1.bf16.msra.mxu0 0
      %1577 = vmatprep.subr.bf16.mxu0 0
      %1578 = vmatpush1.bf16.msra.mxu0 0
      %1579 = vmatprep.subr.bf16.mxu0 0
      %1580 = vmatpush1.bf16.msra.mxu0 0
      %1581 = vmatprep.subr.bf16.mxu0 0
      %1582 = vmatpush1.bf16.msra.mxu0 0
      %1583 = vmatprep.subr.bf16.mxu0 0
      %1584 = vmatpush1.bf16.msra.mxu0 0
      %1585 = vmatprep.subr.bf16.mxu0 0
      %1586 = vmatpush1.bf16.msra.mxu0 0
      %1587 = vmatprep.subr.bf16.mxu0 0
      %1588 = vmatpush1.bf16.msra.mxu0 0
      %1589 = vmatprep.subr.bf16.mxu0 0
      %1590 = vmatpush1.bf16.msra.mxu0 0
      %1591 = vmatprep.mubr.bf16.mxu0 0
      %1592 = vmatmul.mubr.bf16.gmra.mrb[0].mxu0 %v1503
      %v1593 = vpop.f32.mrb[0].mxu0
      %v1594 = vadd.f32 0.0, %v1593
      %v1595 = vpop.f32.mrb[0].mxu0
      %v1596 = vpop.f32.mrb[0].mxu0
      %v1597 = vadd.f32 0.0, %v1596
      %v1598 = vpop.f32.mrb[0].mxu0
      %1599 = vmatprep.mubr.bf16.mxu0 0
      %1600 = vmatmul.mubr.bf16.gmra.mrb[0].mxu0 %v1504
      %v1601 = vpop.f32.mrb[0].mxu0
      %v1602 = vadd.f32 0.0, %v1601
      %v1603 = vpop.f32.mrb[0].mxu0
      %v1604 = vpop.f32.mrb[0].mxu0
      %v1605 = vadd.f32 0.0, %v1604
      %v1606 = vpop.f32.mrb[0].mxu0
      %1607 = vmatprep.mubr.bf16.mxu0 0
      %1608 = vmatmul.mubr.bf16.gmra.mrb[0].mxu0 %v1505
      %v1609 = vpop.f32.mrb[0].mxu0
      %v1610 = vadd.f32 0.0, %v1609
      %v1611 = vpop.f32.mrb[0].mxu0
      %v1612 = vpop.f32.mrb[0].mxu0
      %v1613 = vadd.f32 0.0, %v1612
      %v1614 = vpop.f32.mrb[0].mxu0
      %1615 = vmatprep.mubr.bf16.mxu0 0
      %1616 = vmatmul.mubr.bf16.gmra.mrb[0].mxu0 %v1506
      %v1617 = vpop.f32.mrb[0].mxu0
      %v1618 = vadd.f32 0.0, %v1617
      %v1619 = vpop.f32.mrb[0].mxu0
      %v1620 = vpop.f32.mrb[0].mxu0
      %v1621 = vadd.f32 0.0, %v1620
      %v1622 = vpop.f32.mrb[0].mxu0
      %1623 = vdwg.mxu0
      %v1624 = vadd.f32 %v1433, %v1594
      %v1625 = vadd.f32 %v1436, %v1597
      %v1626 = vadd.f32 %v1441, %v1602
      %v1627 = vadd.f32 %v1444, %v1605
      %v1628 = vadd.f32 %v1449, %v1610
      %v1629 = vadd.f32 %v1452, %v1613
      %v1630 = vadd.f32 %v1457, %v1618
      %v1631 = vadd.f32 %v1460, %v1621
      %v1632 = vld [vmem:[%s5] sm:$0x1]
      %v1634 = vlaneseq
      %v1635 = vshrl.u32 %v1634, 7
      %v1636 = vsub.s32 0, %v1635
      %v1637 = vrot.slane %v1632, %v1636
      %v1639 = vadd.f32 %v1624, %v1637
      %v1640 = vadd.f32 %v1625, %v1637
      %v1641 = vadd.f32 %v1626, %v1637
      %v1642 = vadd.f32 %v1627, %v1637
      %v1643 = vadd.f32 %v1628, %v1637
      %v1644 = vadd.f32 %v1629, %v1637
      %v1645 = vadd.f32 %v1630, %v1637
      %v1646 = vadd.f32 %v1631, %v1637
      %v1647 = vmax.f32 %v1639, 0.0
      %v1648 = vmax.f32 %v1640, 0.0
      %v1649 = vmax.f32 %v1641, 0.0
      %v1650 = vmax.f32 %v1642, 0.0
      %v1651 = vmax.f32 %v1643, 0.0
      %v1652 = vmax.f32 %v1644, 0.0
      %v1653 = vmax.f32 %v1645, 0.0
      %v1654 = vmax.f32 %v1646, 0.0
      %1655 = vst [vmem:[%s328] sm:$0xff] %v1647
      %1656 = vst [vmem:[%s328 + $0x8] sm:$0xff] %v1648
      %1657 = vst [vmem:[%s328 + $0x10] sm:$0xff] %v1649
      %1658 = vst [vmem:[%s328 + $0x18] sm:$0xff] %v1650
      %1659 = vst [vmem:[%s328 + $0x20] sm:$0xff] %v1651
      %1660 = vst [vmem:[%s328 + $0x28] sm:$0xff] %v1652
      %1661 = vst [vmem:[%s328 + $0x30] sm:$0xff] %v1653
      %1662 = vst [vmem:[%s328 + $0x38] sm:$0xff] %v1654
      %s1663 = smul.u32 8, %s22
      %p1664 = scmp.lt.s32.totalorder %s21, 1
      %s1665 = scalar_select %p1664, %s21, 1
      %p1666 = scmp.lt.s32.totalorder %s1663, 7
      %s1667 = scalar_select %p1666, %s1663, 7
      %s1668 = smul.addr %s1665, 8
      %s1669 = sadd.s32 %s1667, %s1668
      %s1670 = smul.addr %s1669, 8
      %s1671 = scalar_lea.vmem %s6, %s1670
      // Predicated region
      $region45: #{basic_block_pallas.3} parent=43 // pred_check
        %p1672 = pneg %p189
      $region46: #{basic_block_pallas.3} parent=43 // pred_check_branch
        %1674 = sbr.rel (%p1672) target = $region48
      $region47: #{basic_block_pallas.3} parent=43 // pred_region
        %s1675 = smul.u32 8, %s22
      $region48: #{basic_block_pallas.3} parent=43 // pred_fallthru
        _
    $region44: #{basic_block_pallas.3} parent=5 // pred_fallthru
      _
    %p1676 = scmp.le.s32.totalorder 2, %s12
    // Predicated region
    $region49: #{basic_block_pallas.3} parent=5 // pred_check
      %p1677 = pneg %p1676
    $region50: #{basic_block_pallas.3} parent=5 // pred_check_branch
      %1679 = sbr.rel (%p1677) target = $region52
    $region51: #{basic_block_pallas.3} parent=5 // pred_region
      %s1680 = ssub.s32 %s12, 2
      // Predicated region
      $region53: #{basic_block_pallas.3} parent=51 // pred_check
        %p1681 = pneg %p195
      $region54: #{basic_block_pallas.3} parent=51 // pred_check_branch
        %1683 = sbr.rel (%p1681) target = $region56
      $region55: #{basic_block_pallas.3} parent=51 // pred_region
        %s1684 = smul.u32 8, %s24
        %p1685 = scmp.lt.s32.totalorder %s23, 1
        %s1686 = scalar_select %p1685, %s23, 1
        %p1687 = scmp.lt.s32.totalorder %s1684, 7
        %s1688 = scalar_select %p1687, %s1684, 7
        %s1689 = smul.addr %s1686, 8
        %s1690 = sadd.s32 %s1688, %s1689
        %s1691 = smul.addr %s1690, 8
        %s1692 = scalar_lea.vmem %s6, %s1691
      $region56: #{basic_block_pallas.3} parent=51 // pred_fallthru
        _
    $region52: #{basic_block_pallas.3} parent=5 // pred_fallthru
      _
  $region6: #{basic_block_pallas.3} parent=0 // loop_footer
    %s16 = sadd.s32 1, %s12
  $region7: #{basic_block_pallas.3} parent=0 // loop_footer_branch
    %11 = sbr.rel target = $region3
  $region8: #{basic_block_pallas.3} parent=0 // loop_exit
    _

</llo_original>
